<compile_context>
chip_gen: v6e
topology: v6e:2x2x1
jax: 0.10.0
libtpu: 0.0.40
codegen_flags: <defaults>
</compile_context>

<pallas_src>
import jax
import jax.numpy as jnp
from jax.experimental import pallas as pl
from jax.experimental.pallas import tpu as pltpu

IMG_DIM = 2048     # resnet50 pooled feature dim
TXT_DIM = 768      # BERT pooler_output dim
HIDDEN = 128       # reduced hidden_size (original default 512); divisible by num_heads=4
BATCH = 8

# static row offsets into the packed bf16 weight slab (multiples of the bf16 (16,128) tile)
_OFF_IMG = 0                         # W1 = w_ip @ w_v @ w_o @ w_c1a      (2048, H)
_OFF_TXT = _OFF_IMG + IMG_DIM        # W2 = w_tp @ w_c1b                  (768, H)
_W_PACK_ROWS = _OFF_TXT + TXT_DIM    # 2816 rows total

# rows of the packed f32 misc tile
_ROW_B1 = 0        # fused hidden-layer bias: b_attn@w_c1a + 2*b_tp@w_c1b + b_c1
_ROW_W_C2 = 1      # classifier output weight as a (1, H) row
_MISC_ROWS = 8     # padded to the f32 (8,128) tile


def _fusion_kernel(img_ref, qf_ref, af_ref, w_pack_ref, misc_ref, b_c2_ref, out_ref):
    f32 = jnp.float32
    bf16 = jnp.bfloat16

    # packed bf16 weights (static, tile-aligned slices)
    w1 = w_pack_ref[_OFF_IMG:_OFF_IMG + IMG_DIM, :]     # (2048, H)
    w2 = w_pack_ref[_OFF_TXT:_OFF_TXT + TXT_DIM, :]     # (768, H)

    b1 = misc_ref[_ROW_B1:_ROW_B1 + 1, :]               # (1, H) f32
    w_c2_row = misc_ref[_ROW_W_C2:_ROW_W_C2 + 1, :]     # (1, H) f32

    # combined text projection is linear in (q + a): one VPU add, one MXU pass.
    text_in = qf_ref[...] + af_ref[...]                  # (B, 768) f32

    # image -> attention -> classifier-half  AND  text -> classifier-half are each a single
    # folded matmul; ReLU applies after the fused linear + bias (exact).
    h1 = (jnp.dot(img_ref[...].astype(bf16), w1, preferred_element_type=f32)
          + jnp.dot(text_in.astype(bf16), w2, preferred_element_type=f32)
          + b1)
    h1 = jnp.maximum(h1, 0.0)

    # final (H -> 1) layer as VPU multiply + XLU lane reduce (no N=1 MXU pass);
    # b_c2 added exactly as a scalar (from SMEM) after the reduce.
    logit = jnp.sum(h1 * w_c2_row, axis=-1, keepdims=True) + b_c2_ref[0]   # (B, 1) f32
    out_ref[...] = 1.0 / (1.0 + jnp.exp(-logit))


def attention_fusion_forward(img_feat, q_feat, a_feat, w_pack, misc, b_c2):
    B = img_feat.shape[0]
    vmem = pl.BlockSpec(memory_space=pltpu.MemorySpace.VMEM)
    smem = pl.BlockSpec(memory_space=pltpu.MemorySpace.SMEM)

    flops = 2 * B * _W_PACK_ROWS * HIDDEN + 4 * B * HIDDEN
    bytes_accessed = (w_pack.size * 2 + misc.size * 4 + b_c2.size * 4
                      + (img_feat.size + q_feat.size + a_feat.size) * 4 + B * 4)

    return pl.pallas_call(
        _fusion_kernel,
        out_shape=jax.ShapeDtypeStruct((B, 1), jnp.float32),
        in_specs=[vmem, vmem, vmem, vmem, vmem, smem],
        out_specs=vmem,
        cost_estimate=pl.CostEstimate(flops=flops, transcendentals=B,
                                      bytes_accessed=bytes_accessed),
    )(img_feat, q_feat, a_feat, w_pack, misc, b_c2)
    # TODO(synk): only if batch grows large enough to amortize a duplicated weight-slab DMA per
    # TensorCore, add grid=(B//TB,) with dimension_semantics=("parallel",), batch-indexed
    # BlockSpecs for the features/output and constant index_maps for w_pack/misc (v7x dual-TC).


# ----------------------------------------------------------------------------
# host-side parameter construction, folding & packing
# ----------------------------------------------------------------------------
def make_params(key):
    """Original (unfolded, f32) module parameters. Linear weights stored (in, out)."""
    ks = jax.random.split(key, 8)

    def lin(k, fan_in, fan_out):
        return (0.02 * jax.random.normal(k, (fan_in, fan_out), jnp.float32),
                jnp.zeros((1, fan_out), jnp.float32) + 0.01)

    p = {}
    p["w_ip"], p["b_ip"] = lin(ks[0], IMG_DIM, HIDDEN)      # image_proj
    p["w_tp"], p["b_tp"] = lin(ks[1], TXT_DIM, HIDDEN)      # text_proj
    p["w_v"], p["b_v"] = lin(ks[2], HIDDEN, HIDDEN)         # MHA in_proj (v); q/k are dead (seq=1)
    p["w_o"], p["b_o"] = lin(ks[3], HIDDEN, HIDDEN)         # MHA out_proj
    p["w_c1"], p["b_c1"] = lin(ks[4], 2 * HIDDEN, HIDDEN)   # classifier[1]
    p["w_c2"], p["b_c2"] = lin(ks[5], HIDDEN, 1)            # classifier[3]
    return p


def pack_params(p):
    """Fold image_proj -> v_proj -> out_proj -> classifier-half (and text_proj -> classifier-half)
    in f32, cast to bf16 once, pack into 3 kernel inputs."""
    w_vo = p["w_v"] @ p["w_o"]                               # (H, H)
    b_vo = p["b_v"] @ p["w_o"] + p["b_o"]                    # (1, H)
    w_img_attn = p["w_ip"] @ w_vo                            # (2048, H)
    b_img_attn = p["b_ip"] @ w_vo + b_vo                     # (1, H)
    w_c1a = p["w_c1"][:HIDDEN, :]                            # acts on attn_out
    w_c1b = p["w_c1"][HIDDEN:, :]                            # acts on text_c

    w1 = w_img_attn @ w_c1a                                  # (2048, H)
    w2 = p["w_tp"] @ w_c1b                                   # (768, H)
    b1 = b_img_attn @ w_c1a + 2.0 * (p["b_tp"] @ w_c1b) + p["b_c1"]   # (1, H)

    w_pack = jnp.concatenate([w1, w2], axis=0).astype(jnp.bfloat16)   # (2816, 128) bf16
    assert w_pack.shape == (_W_PACK_ROWS, HIDDEN)

    misc = jnp.zeros((_MISC_ROWS, HIDDEN), jnp.float32)
    misc = misc.at[_ROW_B1].set(b1[0])
    misc = misc.at[_ROW_W_C2].set(p["w_c2"][:, 0])

    b_c2 = p["b_c2"].reshape((1,)).astype(jnp.float32)       # SMEM scalar
    return w_pack, misc, b_c2


def _reference(img_feat, q_feat, a_feat, p):
    """Pure-JAX f32 reference matching the original PyTorch forward (post-backbone)."""
    img_p = img_feat @ p["w_ip"] + p["b_ip"]
    text_c = (q_feat @ p["w_tp"] + p["b_tp"]) + (a_feat @ p["w_tp"] + p["b_tp"])
    # MHA with a single key position: softmax == 1 -> output = out_proj(v_proj(img_p))
    V = img_p @ p["w_v"] + p["b_v"]
    attn_out = V @ p["w_o"] + p["b_o"]
    fused = jnp.concatenate([attn_out, text_c], axis=1)
    h1 = jnp.maximum(fused @ p["w_c1"] + p["b_c1"], 0.0)
    return jax.nn.sigmoid(h1 @ p["w_c2"] + p["b_c2"])


if __name__ == "__main__":
    key = jax.random.PRNGKey(0)
    k_img, k_q, k_a, k_p = jax.random.split(key, 4)
    img_feat = jax.random.normal(k_img, (BATCH, IMG_DIM), jnp.float32)
    q_feat = jax.random.normal(k_q, (BATCH, TXT_DIM), jnp.float32)
    a_feat = jax.random.normal(k_a, (BATCH, TXT_DIM), jnp.float32)

    params = make_params(k_p)
    w_pack, misc, b_c2 = pack_params(params)

    out = attention_fusion_forward(img_feat, q_feat, a_feat, w_pack, misc, b_c2)
    out = jax.block_until_ready(out)

    ref = _reference(img_feat, q_feat, a_feat, params)
    assert out.shape == (BATCH, 1)
    # bf16 weights + host-side folding change accumulation order -> loosened tolerance
    assert jnp.allclose(out, ref, atol=1e-2, rtol=1e-2), float(jnp.max(jnp.abs(out - ref)))
    print("KERNEL_OK")
</pallas_src>

<mosaic_0001>
module attributes {stable_mosaic.version = 11 : i64} {
  func.func @_fusion_kernel(%arg0: memref<8x2048xf32, #tpu.memory_space<vmem>>, %arg1: memref<8x768xf32, #tpu.memory_space<vmem>>, %arg2: memref<8x768xf32, #tpu.memory_space<vmem>>, %arg3: memref<2816x128xbf16, #tpu.memory_space<vmem>>, %arg4: memref<8x128xf32, #tpu.memory_space<vmem>>, %arg5: memref<1xf32, #tpu.memory_space<smem>>, %arg6: memref<8x1xf32, #tpu.memory_space<vmem>>) attributes {dimension_semantics = [], scalar_prefetch = 0 : i64, scratch_operands = 0 : i64, tpu.core_type = #tpu.core_type<tc>} {
    %c0 = arith.constant 0 : index
    %c0_0 = arith.constant 0 : index
    %0 = vector.load %arg3[%c0, %c0_0] : memref<2816x128xbf16, #tpu.memory_space<vmem>>, vector<2048x128xbf16>
    %c2048 = arith.constant 2048 : index
    %c0_1 = arith.constant 0 : index
    %1 = vector.load %arg3[%c2048, %c0_1] : memref<2816x128xbf16, #tpu.memory_space<vmem>>, vector<768x128xbf16>
    %c0_2 = arith.constant 0 : index
    %c0_3 = arith.constant 0 : index
    %2 = vector.load %arg4[%c0_2, %c0_3] : memref<8x128xf32, #tpu.memory_space<vmem>>, vector<1x128xf32>
    %c1 = arith.constant 1 : index
    %c0_4 = arith.constant 0 : index
    %3 = vector.load %arg4[%c1, %c0_4] : memref<8x128xf32, #tpu.memory_space<vmem>>, vector<1x128xf32>
    %c0_5 = arith.constant 0 : index
    %c0_6 = arith.constant 0 : index
    %4 = vector.load %arg1[%c0_5, %c0_6] : memref<8x768xf32, #tpu.memory_space<vmem>>, vector<8x768xf32>
    %c0_7 = arith.constant 0 : index
    %c0_8 = arith.constant 0 : index
    %5 = vector.load %arg2[%c0_7, %c0_8] : memref<8x768xf32, #tpu.memory_space<vmem>>, vector<8x768xf32>
    %6 = arith.addf %4, %5 : vector<8x768xf32>
    %c0_9 = arith.constant 0 : index
    %c0_10 = arith.constant 0 : index
    %7 = vector.load %arg0[%c0_9, %c0_10] : memref<8x2048xf32, #tpu.memory_space<vmem>>, vector<8x2048xf32>
    %8 = arith.truncf %7 : vector<8x2048xf32> to vector<8x2048xbf16>
    %cst = arith.constant dense<0.000000e+00> : vector<8x128xf32>
    %9 = tpu.matmul %8, %0, %cst {dimension_numbers = #tpu.dot_dimension_numbers<[1], [0], [0], [1], [0, 0, 1, 1], [], []>} : vector<8x2048xbf16>, vector<2048x128xbf16>, vector<8x128xf32> -> vector<8x128xf32>
    %10 = arith.truncf %6 : vector<8x768xf32> to vector<8x768xbf16>
    %cst_11 = arith.constant dense<0.000000e+00> : vector<8x128xf32>
    %11 = tpu.matmul %10, %1, %cst_11 {dimension_numbers = #tpu.dot_dimension_numbers<[1], [0], [0], [1], [0, 0, 1, 1], [], []>} : vector<8x768xbf16>, vector<768x128xbf16>, vector<8x128xf32> -> vector<8x128xf32>
    %12 = arith.addf %9, %11 : vector<8x128xf32>
    %13 = vector.broadcast %2 : vector<1x128xf32> to vector<8x128xf32>
    %14 = arith.addf %12, %13 : vector<8x128xf32>
    %cst_12 = arith.constant 0.000000e+00 : f32
    %15 = vector.broadcast %cst_12 : f32 to vector<8x128xf32>
    %16 = arith.maximumf %14, %15 : vector<8x128xf32>
    %17 = vector.broadcast %3 : vector<1x128xf32> to vector<8x128xf32>
    %18 = arith.mulf %16, %17 : vector<8x128xf32>
    %cst_13 = arith.constant dense<0.000000e+00> : vector<8xf32>
    %19 = vector.multi_reduction <add>, %18, %cst_13 [1] : vector<8x128xf32> to vector<8xf32>
    %20 = vector.shape_cast %19 : vector<8xf32> to vector<8x1xf32>
    %c0_14 = arith.constant 0 : index
    %21 = memref.load %arg5[%c0_14] : memref<1xf32, #tpu.memory_space<smem>>
    %22 = vector.broadcast %21 : f32 to vector<8x1xf32>
    %23 = arith.addf %20, %22 : vector<8x1xf32>
    %cst_15 = arith.constant 0.000000e+00 : f32
    %24 = vector.broadcast %cst_15 : f32 to vector<8x1xf32>
    %25 = arith.subf %24, %23 : vector<8x1xf32>
    %26 = math.exp %25 : vector<8x1xf32>
    %cst_16 = arith.constant 1.000000e+00 : f32
    %27 = vector.broadcast %cst_16 : f32 to vector<8x1xf32>
    %28 = arith.addf %27, %26 : vector<8x1xf32>
    %cst_17 = arith.constant 1.000000e+00 : f32
    %29 = vector.broadcast %cst_17 : f32 to vector<8x1xf32>
    %30 = arith.divf %29, %28 : vector<8x1xf32>
    %c0_18 = arith.constant 0 : index
    %c0_19 = arith.constant 0 : index
    %31 = vector.load %arg6[%c0_18, %c0_19] : memref<8x1xf32, #tpu.memory_space<vmem>>, vector<8x1xf32>
    tpu.vector_store %arg6[%c0_18, %c0_19], %30 {strides = array<i32>} : memref<8x1xf32, #tpu.memory_space<vmem>>, vector<8x1xf32>,
    return
  }
}

</mosaic_0001>

<llo_original>
// kernel: tpu_custom_call.1
$region0: #{tpu_custom_call.1}
  #allocation0 [shape = 'u32[]', space=smem, size = 0x4, offset = 0x4, fixed_abs, tag = 'smem constant byte address 0x4 - core index']
  #allocation1 [shape = 'u32[144,128]{1,0:T(1,128)}', space=vmem, size = 0x12000, scoped, tag = 'internal scratch']
  #allocation2 [shape = 'f32[1]{0:T(128)S(6)}', space=smem, size = 0x200, scoped, tag = 'scoped memory for tpu_custom_call.1']
  %s0 = inlined_call_operand.hbm [shape: f32[8,2048], index: 0, kind: input, shape index: {}]
  %s1 = inlined_call_operand.hbm [shape: f32[8,768], index: 1, kind: input, shape index: {}]
  %s2 = inlined_call_operand.hbm [shape: f32[8,768], index: 2, kind: input, shape index: {}]
  %s3 = inlined_call_operand.hbm [shape: bf16[2816,128], index: 3, kind: input, shape index: {}]
  %s4 = inlined_call_operand.vmem [shape: f32[8,128], index: 4, kind: input, shape index: {}]
  %s5 = inlined_call_operand.<no memory space> [shape: f32[1], index: 5, kind: input, shape index: {}]
  %s6 = inlined_call_operand.vmem [shape: f32[8,1], index: 6, kind: output, shape index: {}]
  %s7 = sld [smem:[#allocation0]]
  $region50: #{tpu_custom_call.1} parent=0
    _
  %s9 = ssub.s32 1, %s7
  %s10 = scalar_select 0, %s9, %s7
  %11 = sst [smem:[#allocation2]] %s5
  $region1: #{tpu_custom_call.1} parent=0
    #allocation3 [shape = 'u8[65536]{0}', space=vmem, size = 0x10000, scoped, tag = 'input window, operand 0, single buffered']
    #allocation4 [shape = 's32[1]{0}', space=sflag, size = 0x4, scoped, tag = 'scoped memory for tpu_custom_call.1']
    #allocation5 [shape = 'u8[24576]{0}', space=vmem, size = 0x6000, scoped, tag = 'input window, operand 1, single buffered']
    #allocation6 [shape = 's32[1]{0}', space=sflag, size = 0x4, scoped, tag = 'scoped memory for tpu_custom_call.1']
    #allocation7 [shape = 'u8[24576]{0}', space=vmem, size = 0x6000, scoped, tag = 'input window, operand 2, single buffered']
    #allocation8 [shape = 'u8[720896]{0}', space=vmem, size = 0xb0000, scoped, tag = 'input window, operand 3, single buffered']
    #allocation9 [shape = 's32[1]{0}', space=sflag, size = 0x4, scoped, tag = 'scoped memory for tpu_custom_call.1']
    %12 = vsyncpa [#allocation4], 0
    %13 = vsyncpa [#allocation6], 0
    %14 = vsyncpa [#allocation9], 0
    // Predicated region
    $region2: #{tpu_custom_call.1} parent=1 // pred_check
      _
    $region3: #{tpu_custom_call.1} parent=1 // pred_check_branch
      %16 = sbr.rel (0) target = $region5
    $region4: #{tpu_custom_call.1} parent=1 // pred_region
      %s18 = ssub.s32 2048, 2048
      %19 = vsyncadd [#allocation4], %s18
      %s21 = sshll.u32 [#allocation3], 4
      %s22 = int_to_ptr.vmem [resolvable:$true] %s21
      %24 = dma.hbm_to_vmem [thread:$0]  %s0, 2048, %s22, [#allocation4]
    $region5: #{tpu_custom_call.1} parent=1 // pred_fallthru
      _
    // Predicated region
    $region6: #{tpu_custom_call.1} parent=1 // pred_check
      _
    $region7: #{tpu_custom_call.1} parent=1 // pred_check_branch
      %26 = sbr.rel (0) target = $region9
    $region8: #{tpu_custom_call.1} parent=1 // pred_region
      %s28 = ssub.s32 768, 768
      %29 = vsyncadd [#allocation6], %s28
      %s31 = sshll.u32 [#allocation5], 4
      %s32 = int_to_ptr.vmem [resolvable:$true] %s31
      %34 = dma.hbm_to_vmem [thread:$0]  %s1, 768, %s32, [#allocation6]
    $region9: #{tpu_custom_call.1} parent=1 // pred_fallthru
      _
    // Predicated region
    $region10: #{tpu_custom_call.1} parent=1 // pred_check
      _
    $region11: #{tpu_custom_call.1} parent=1 // pred_check_branch
      %36 = sbr.rel (0) target = $region13
    $region12: #{tpu_custom_call.1} parent=1 // pred_region
      %s38 = ssub.s32 768, 768
      %39 = vsyncadd [#allocation6], %s38
      %s41 = sshll.u32 [#allocation7], 4
      %s42 = int_to_ptr.vmem [resolvable:$true] %s41
      %44 = dma.hbm_to_vmem [thread:$0]  %s2, 768, %s42, [#allocation6]
    $region13: #{tpu_custom_call.1} parent=1 // pred_fallthru
      _
    // Predicated region
    $region14: #{tpu_custom_call.1} parent=1 // pred_check
      _
    $region15: #{tpu_custom_call.1} parent=1 // pred_check_branch
      %46 = sbr.rel (0) target = $region17
    $region16: #{tpu_custom_call.1} parent=1 // pred_region
      %s48 = ssub.s32 22528, 22528
      %49 = vsyncadd [#allocation9], %s48
      %s50 = sshll.u32 [#allocation8], 4
      %s51 = int_to_ptr.vmem [resolvable:$true] %s50
      %56 = dma.hbm_to_vmem [thread:$0]  %s3, 22528, %s51, [#allocation9], 64, 64, 4
    $region17: #{tpu_custom_call.1} parent=1 // pred_fallthru
      _
    // Predicated region
    $region18: #{tpu_custom_call.1} parent=1 // pred_check
      _
    $region19: #{tpu_custom_call.1} parent=1 // pred_check_branch
      %58 = sbr.rel (0) target = $region21
    $region20: #{tpu_custom_call.1} parent=1 // pred_region
      _
    $region21: #{tpu_custom_call.1} parent=1 // pred_fallthru
      _
    // Predicated region
    $region22: #{tpu_custom_call.1} parent=1 // pred_check
      _
    $region23: #{tpu_custom_call.1} parent=1 // pred_check_branch
      %60 = sbr.rel (0) target = $region25
    $region24: #{tpu_custom_call.1} parent=1 // pred_region
      _
    $region25: #{tpu_custom_call.1} parent=1 // pred_fallthru
      _
    // Predicated region
    $region26: #{tpu_custom_call.1} parent=1 // pred_check
      _
    $region27: #{tpu_custom_call.1} parent=1 // pred_check_branch
      %62 = sbr.rel (0) target = $region29
    $region28: #{tpu_custom_call.1} parent=1 // pred_region
      %63 = dma.done [#allocation4], 2048
    $region29: #{tpu_custom_call.1} parent=1 // pred_fallthru
      _
    // Predicated region
    $region30: #{tpu_custom_call.1} parent=1 // pred_check
      _
    $region31: #{tpu_custom_call.1} parent=1 // pred_check_branch
      %65 = sbr.rel (0) target = $region33
    $region32: #{tpu_custom_call.1} parent=1 // pred_region
      %66 = dma.done [#allocation6], 768
    $region33: #{tpu_custom_call.1} parent=1 // pred_fallthru
      _
    // Predicated region
    $region34: #{tpu_custom_call.1} parent=1 // pred_check
      _
    $region35: #{tpu_custom_call.1} parent=1 // pred_check_branch
      %68 = sbr.rel (0) target = $region37
    $region36: #{tpu_custom_call.1} parent=1 // pred_region
      %69 = dma.done [#allocation6], 768
    $region37: #{tpu_custom_call.1} parent=1 // pred_fallthru
      _
    // Predicated region
    $region38: #{tpu_custom_call.1} parent=1 // pred_check
      _
    $region39: #{tpu_custom_call.1} parent=1 // pred_check_branch
      %71 = sbr.rel (0) target = $region41
    $region40: #{tpu_custom_call.1} parent=1 // pred_region
      %72 = dma.done [#allocation9], 22528
    $region41: #{tpu_custom_call.1} parent=1 // pred_fallthru
      _
    %v74 = vld [vmem:[#allocation8] sm:$0xf]
    %v75 = vld [vmem:[#allocation8 + $0x4] sm:$0xf]
    %v76 = vld [vmem:[#allocation8 + $0x8] sm:$0xf]
    %v77 = vld [vmem:[#allocation8 + $0xc] sm:$0xf]
    %v78 = vld [vmem:[#allocation8 + $0x10] sm:$0xf]
    %v79 = vld [vmem:[#allocation8 + $0x14] sm:$0xf]
    %v80 = vld [vmem:[#allocation8 + $0x18] sm:$0xf]
    %v81 = vld [vmem:[#allocation8 + $0x1c] sm:$0xf]
    %v82 = vld [vmem:[#allocation8 + $0x20] sm:$0xf]
    %v83 = vld [vmem:[#allocation8 + $0x24] sm:$0xf]
    %v84 = vld [vmem:[#allocation8 + $0x28] sm:$0xf]
    %v85 = vld [vmem:[#allocation8 + $0x2c] sm:$0xf]
    %v86 = vld [vmem:[#allocation8 + $0x30] sm:$0xf]
    %v87 = vld [vmem:[#allocation8 + $0x34] sm:$0xf]
    %v88 = vld [vmem:[#allocation8 + $0x38] sm:$0xf]
    %v89 = vld [vmem:[#allocation8 + $0x3c] sm:$0xf]
    %v90 = vld [vmem:[#allocation8 + $0x40] sm:$0xf]
    %v91 = vld [vmem:[#allocation8 + $0x44] sm:$0xf]
    %v92 = vld [vmem:[#allocation8 + $0x48] sm:$0xf]
    %v93 = vld [vmem:[#allocation8 + $0x4c] sm:$0xf]
    %v94 = vld [vmem:[#allocation8 + $0x50] sm:$0xf]
    %v95 = vld [vmem:[#allocation8 + $0x54] sm:$0xf]
    %v96 = vld [vmem:[#allocation8 + $0x58] sm:$0xf]
    %v97 = vld [vmem:[#allocation8 + $0x5c] sm:$0xf]
    %v98 = vld [vmem:[#allocation8 + $0x60] sm:$0xf]
    %v99 = vld [vmem:[#allocation8 + $0x64] sm:$0xf]
    %v100 = vld [vmem:[#allocation8 + $0x68] sm:$0xf]
    %v101 = vld [vmem:[#allocation8 + $0x6c] sm:$0xf]
    %v102 = vld [vmem:[#allocation8 + $0x70] sm:$0xf]
    %v103 = vld [vmem:[#allocation8 + $0x74] sm:$0xf]
    %v104 = vld [vmem:[#allocation8 + $0x78] sm:$0xf]
    %v105 = vld [vmem:[#allocation8 + $0x7c] sm:$0xf]
    %v106 = vld [vmem:[#allocation8 + $0x80] sm:$0xf]
    %v107 = vld [vmem:[#allocation8 + $0x84] sm:$0xf]
    %v108 = vld [vmem:[#allocation8 + $0x88] sm:$0xf]
    %v109 = vld [vmem:[#allocation8 + $0x8c] sm:$0xf]
    %v110 = vld [vmem:[#allocation8 + $0x90] sm:$0xf]
    %v111 = vld [vmem:[#allocation8 + $0x94] sm:$0xf]
    %v112 = vld [vmem:[#allocation8 + $0x98] sm:$0xf]
    %v113 = vld [vmem:[#allocation8 + $0x9c] sm:$0xf]
    %v114 = vld [vmem:[#allocation8 + $0xa0] sm:$0xf]
    %v115 = vld [vmem:[#allocation8 + $0xa4] sm:$0xf]
    %v116 = vld [vmem:[#allocation8 + $0xa8] sm:$0xf]
    %v117 = vld [vmem:[#allocation8 + $0xac] sm:$0xf]
    %v118 = vld [vmem:[#allocation8 + $0xb0] sm:$0xf]
    %v119 = vld [vmem:[#allocation8 + $0xb4] sm:$0xf]
    %v120 = vld [vmem:[#allocation8 + $0xb8] sm:$0xf]
    %v121 = vld [vmem:[#allocation8 + $0xbc] sm:$0xf]
    %v122 = vld [vmem:[#allocation8 + $0xc0] sm:$0xf]
    %v123 = vld [vmem:[#allocation8 + $0xc4] sm:$0xf]
    %v124 = vld [vmem:[#allocation8 + $0xc8] sm:$0xf]
    %v125 = vld [vmem:[#allocation8 + $0xcc] sm:$0xf]
    %v126 = vld [vmem:[#allocation8 + $0xd0] sm:$0xf]
    %v127 = vld [vmem:[#allocation8 + $0xd4] sm:$0xf]
    %v128 = vld [vmem:[#allocation8 + $0xd8] sm:$0xf]
    %v129 = vld [vmem:[#allocation8 + $0xdc] sm:$0xf]
    %v130 = vld [vmem:[#allocation8 + $0xe0] sm:$0xf]
    %v131 = vld [vmem:[#allocation8 + $0xe4] sm:$0xf]
    %v132 = vld [vmem:[#allocation8 + $0xe8] sm:$0xf]
    %v133 = vld [vmem:[#allocation8 + $0xec] sm:$0xf]
    %v134 = vld [vmem:[#allocation8 + $0xf0] sm:$0xf]
    %v135 = vld [vmem:[#allocation8 + $0xf4] sm:$0xf]
    %v136 = vld [vmem:[#allocation8 + $0xf8] sm:$0xf]
    %v137 = vld [vmem:[#allocation8 + $0xfc] sm:$0xf]
    %v138 = vld [vmem:[#allocation8 + $0x100] sm:$0xf]
    %v139 = vld [vmem:[#allocation8 + $0x104] sm:$0xf]
    %v140 = vld [vmem:[#allocation8 + $0x108] sm:$0xf]
    %v141 = vld [vmem:[#allocation8 + $0x10c] sm:$0xf]
    %v142 = vld [vmem:[#allocation8 + $0x110] sm:$0xf]
    %v143 = vld [vmem:[#allocation8 + $0x114] sm:$0xf]
    %v144 = vld [vmem:[#allocation8 + $0x118] sm:$0xf]
    %v145 = vld [vmem:[#allocation8 + $0x11c] sm:$0xf]
    %v146 = vld [vmem:[#allocation8 + $0x120] sm:$0xf]
    %v147 = vld [vmem:[#allocation8 + $0x124] sm:$0xf]
    %v148 = vld [vmem:[#allocation8 + $0x128] sm:$0xf]
    %v149 = vld [vmem:[#allocation8 + $0x12c] sm:$0xf]
    %v150 = vld [vmem:[#allocation8 + $0x130] sm:$0xf]
    %v151 = vld [vmem:[#allocation8 + $0x134] sm:$0xf]
    %v152 = vld [vmem:[#allocation8 + $0x138] sm:$0xf]
    %v153 = vld [vmem:[#allocation8 + $0x13c] sm:$0xf]
    %v154 = vld [vmem:[#allocation8 + $0x140] sm:$0xf]
    %v155 = vld [vmem:[#allocation8 + $0x144] sm:$0xf]
    %v156 = vld [vmem:[#allocation8 + $0x148] sm:$0xf]
    %v157 = vld [vmem:[#allocation8 + $0x14c] sm:$0xf]
    %v158 = vld [vmem:[#allocation8 + $0x150] sm:$0xf]
    %v159 = vld [vmem:[#allocation8 + $0x154] sm:$0xf]
    %v160 = vld [vmem:[#allocation8 + $0x158] sm:$0xf]
    %v161 = vld [vmem:[#allocation8 + $0x15c] sm:$0xf]
    %v162 = vld [vmem:[#allocation8 + $0x160] sm:$0xf]
    %v163 = vld [vmem:[#allocation8 + $0x164] sm:$0xf]
    %v164 = vld [vmem:[#allocation8 + $0x168] sm:$0xf]
    %v165 = vld [vmem:[#allocation8 + $0x16c] sm:$0xf]
    %v166 = vld [vmem:[#allocation8 + $0x170] sm:$0xf]
    %v167 = vld [vmem:[#allocation8 + $0x174] sm:$0xf]
    %v168 = vld [vmem:[#allocation8 + $0x178] sm:$0xf]
    %v169 = vld [vmem:[#allocation8 + $0x17c] sm:$0xf]
    %v170 = vld [vmem:[#allocation8 + $0x180] sm:$0xf]
    %v171 = vld [vmem:[#allocation8 + $0x184] sm:$0xf]
    %v172 = vld [vmem:[#allocation8 + $0x188] sm:$0xf]
    %v173 = vld [vmem:[#allocation8 + $0x18c] sm:$0xf]
    %v174 = vld [vmem:[#allocation8 + $0x190] sm:$0xf]
    %v175 = vld [vmem:[#allocation8 + $0x194] sm:$0xf]
    %v176 = vld [vmem:[#allocation8 + $0x198] sm:$0xf]
    %v177 = vld [vmem:[#allocation8 + $0x19c] sm:$0xf]
    %v178 = vld [vmem:[#allocation8 + $0x1a0] sm:$0xf]
    %v179 = vld [vmem:[#allocation8 + $0x1a4] sm:$0xf]
    %v180 = vld [vmem:[#allocation8 + $0x1a8] sm:$0xf]
    %v181 = vld [vmem:[#allocation8 + $0x1ac] sm:$0xf]
    %v182 = vld [vmem:[#allocation8 + $0x1b0] sm:$0xf]
    %v183 = vld [vmem:[#allocation8 + $0x1b4] sm:$0xf]
    %v184 = vld [vmem:[#allocation8 + $0x1b8] sm:$0xf]
    %v185 = vld [vmem:[#allocation8 + $0x1bc] sm:$0xf]
    %v186 = vld [vmem:[#allocation8 + $0x1c0] sm:$0xf]
    %v187 = vld [vmem:[#allocation8 + $0x1c4] sm:$0xf]
    %v188 = vld [vmem:[#allocation8 + $0x1c8] sm:$0xf]
    %v189 = vld [vmem:[#allocation8 + $0x1cc] sm:$0xf]
    %v190 = vld [vmem:[#allocation8 + $0x1d0] sm:$0xf]
    %v191 = vld [vmem:[#allocation8 + $0x1d4] sm:$0xf]
    %v192 = vld [vmem:[#allocation8 + $0x1d8] sm:$0xf]
    %v193 = vld [vmem:[#allocation8 + $0x1dc] sm:$0xf]
    %v194 = vld [vmem:[#allocation8 + $0x1e0] sm:$0xf]
    %v195 = vld [vmem:[#allocation8 + $0x1e4] sm:$0xf]
    %v196 = vld [vmem:[#allocation8 + $0x1e8] sm:$0xf]
    %v197 = vld [vmem:[#allocation8 + $0x1ec] sm:$0xf]
    %v198 = vld [vmem:[#allocation8 + $0x1f0] sm:$0xf]
    %v199 = vld [vmem:[#allocation8 + $0x1f4] sm:$0xf]
    %v200 = vld [vmem:[#allocation8 + $0x1f8] sm:$0xf]
    %v201 = vld [vmem:[#allocation8 + $0x1fc] sm:$0xf]
    %v202 = vld [vmem:[#allocation8 + $0x200] sm:$0xf]
    %v203 = vld [vmem:[#allocation8 + $0x204] sm:$0xf]
    %v204 = vld [vmem:[#allocation8 + $0x208] sm:$0xf]
    %v205 = vld [vmem:[#allocation8 + $0x20c] sm:$0xf]
    %v206 = vld [vmem:[#allocation8 + $0x210] sm:$0xf]
    %v207 = vld [vmem:[#allocation8 + $0x214] sm:$0xf]
    %v208 = vld [vmem:[#allocation8 + $0x218] sm:$0xf]
    %v209 = vld [vmem:[#allocation8 + $0x21c] sm:$0xf]
    %v210 = vld [vmem:[#allocation8 + $0x220] sm:$0xf]
    %v211 = vld [vmem:[#allocation8 + $0x224] sm:$0xf]
    %v212 = vld [vmem:[#allocation8 + $0x228] sm:$0xf]
    %v213 = vld [vmem:[#allocation8 + $0x22c] sm:$0xf]
    %v214 = vld [vmem:[#allocation8 + $0x230] sm:$0xf]
    %v215 = vld [vmem:[#allocation8 + $0x234] sm:$0xf]
    %v216 = vld [vmem:[#allocation8 + $0x238] sm:$0xf]
    %v217 = vld [vmem:[#allocation8 + $0x23c] sm:$0xf]
    %v218 = vld [vmem:[#allocation8 + $0x240] sm:$0xf]
    %v219 = vld [vmem:[#allocation8 + $0x244] sm:$0xf]
    %v220 = vld [vmem:[#allocation8 + $0x248] sm:$0xf]
    %v221 = vld [vmem:[#allocation8 + $0x24c] sm:$0xf]
    %v222 = vld [vmem:[#allocation8 + $0x250] sm:$0xf]
    %v223 = vld [vmem:[#allocation8 + $0x254] sm:$0xf]
    %v224 = vld [vmem:[#allocation8 + $0x258] sm:$0xf]
    %v225 = vld [vmem:[#allocation8 + $0x25c] sm:$0xf]
    %v226 = vld [vmem:[#allocation8 + $0x260] sm:$0xf]
    %v227 = vld [vmem:[#allocation8 + $0x264] sm:$0xf]
    %v228 = vld [vmem:[#allocation8 + $0x268] sm:$0xf]
    %v229 = vld [vmem:[#allocation8 + $0x26c] sm:$0xf]
    %v230 = vld [vmem:[#allocation8 + $0x270] sm:$0xf]
    %v231 = vld [vmem:[#allocation8 + $0x274] sm:$0xf]
    %v232 = vld [vmem:[#allocation8 + $0x278] sm:$0xf]
    %v233 = vld [vmem:[#allocation8 + $0x27c] sm:$0xf]
    %v234 = vld [vmem:[#allocation8 + $0x280] sm:$0xf]
    %v235 = vld [vmem:[#allocation8 + $0x284] sm:$0xf]
    %v236 = vld [vmem:[#allocation8 + $0x288] sm:$0xf]
    %v237 = vld [vmem:[#allocation8 + $0x28c] sm:$0xf]
    %v238 = vld [vmem:[#allocation8 + $0x290] sm:$0xf]
    %v239 = vld [vmem:[#allocation8 + $0x294] sm:$0xf]
    %v240 = vld [vmem:[#allocation8 + $0x298] sm:$0xf]
    %v241 = vld [vmem:[#allocation8 + $0x29c] sm:$0xf]
    %v242 = vld [vmem:[#allocation8 + $0x2a0] sm:$0xf]
    %v243 = vld [vmem:[#allocation8 + $0x2a4] sm:$0xf]
    %v244 = vld [vmem:[#allocation8 + $0x2a8] sm:$0xf]
    %v245 = vld [vmem:[#allocation8 + $0x2ac] sm:$0xf]
    %v246 = vld [vmem:[#allocation8 + $0x2b0] sm:$0xf]
    %v247 = vld [vmem:[#allocation8 + $0x2b4] sm:$0xf]
    %v248 = vld [vmem:[#allocation8 + $0x2b8] sm:$0xf]
    %v249 = vld [vmem:[#allocation8 + $0x2bc] sm:$0xf]
    %v250 = vld [vmem:[#allocation8 + $0x2c0] sm:$0xf]
    %v251 = vld [vmem:[#allocation8 + $0x2c4] sm:$0xf]
    %v252 = vld [vmem:[#allocation8 + $0x2c8] sm:$0xf]
    %v253 = vld [vmem:[#allocation8 + $0x2cc] sm:$0xf]
    %v254 = vld [vmem:[#allocation8 + $0x2d0] sm:$0xf]
    %v255 = vld [vmem:[#allocation8 + $0x2d4] sm:$0xf]
    %v256 = vld [vmem:[#allocation8 + $0x2d8] sm:$0xf]
    %v257 = vld [vmem:[#allocation8 + $0x2dc] sm:$0xf]
    %v258 = vld [vmem:[#allocation8 + $0x2e0] sm:$0xf]
    %v259 = vld [vmem:[#allocation8 + $0x2e4] sm:$0xf]
    %v260 = vld [vmem:[#allocation8 + $0x2e8] sm:$0xf]
    %v261 = vld [vmem:[#allocation8 + $0x2ec] sm:$0xf]
    %v262 = vld [vmem:[#allocation8 + $0x2f0] sm:$0xf]
    %v263 = vld [vmem:[#allocation8 + $0x2f4] sm:$0xf]
    %v264 = vld [vmem:[#allocation8 + $0x2f8] sm:$0xf]
    %v265 = vld [vmem:[#allocation8 + $0x2fc] sm:$0xf]
    %v266 = vld [vmem:[#allocation8 + $0x300] sm:$0xf]
    %v267 = vld [vmem:[#allocation8 + $0x304] sm:$0xf]
    %v268 = vld [vmem:[#allocation8 + $0x308] sm:$0xf]
    %v269 = vld [vmem:[#allocation8 + $0x30c] sm:$0xf]
    %v270 = vld [vmem:[#allocation8 + $0x310] sm:$0xf]
    %v271 = vld [vmem:[#allocation8 + $0x314] sm:$0xf]
    %v272 = vld [vmem:[#allocation8 + $0x318] sm:$0xf]
    %v273 = vld [vmem:[#allocation8 + $0x31c] sm:$0xf]
    %v274 = vld [vmem:[#allocation8 + $0x320] sm:$0xf]
    %v275 = vld [vmem:[#allocation8 + $0x324] sm:$0xf]
    %v276 = vld [vmem:[#allocation8 + $0x328] sm:$0xf]
    %v277 = vld [vmem:[#allocation8 + $0x32c] sm:$0xf]
    %v278 = vld [vmem:[#allocation8 + $0x330] sm:$0xf]
    %v279 = vld [vmem:[#allocation8 + $0x334] sm:$0xf]
    %v280 = vld [vmem:[#allocation8 + $0x338] sm:$0xf]
    %v281 = vld [vmem:[#allocation8 + $0x33c] sm:$0xf]
    %v282 = vld [vmem:[#allocation8 + $0x340] sm:$0xf]
    %v283 = vld [vmem:[#allocation8 + $0x344] sm:$0xf]
    %v284 = vld [vmem:[#allocation8 + $0x348] sm:$0xf]
    %v285 = vld [vmem:[#allocation8 + $0x34c] sm:$0xf]
    %v286 = vld [vmem:[#allocation8 + $0x350] sm:$0xf]
    %v287 = vld [vmem:[#allocation8 + $0x354] sm:$0xf]
    %v288 = vld [vmem:[#allocation8 + $0x358] sm:$0xf]
    %v289 = vld [vmem:[#allocation8 + $0x35c] sm:$0xf]
    %v290 = vld [vmem:[#allocation8 + $0x360] sm:$0xf]
    %v291 = vld [vmem:[#allocation8 + $0x364] sm:$0xf]
    %v292 = vld [vmem:[#allocation8 + $0x368] sm:$0xf]
    %v293 = vld [vmem:[#allocation8 + $0x36c] sm:$0xf]
    %v294 = vld [vmem:[#allocation8 + $0x370] sm:$0xf]
    %v295 = vld [vmem:[#allocation8 + $0x374] sm:$0xf]
    %v296 = vld [vmem:[#allocation8 + $0x378] sm:$0xf]
    %v297 = vld [vmem:[#allocation8 + $0x37c] sm:$0xf]
    %v298 = vld [vmem:[#allocation8 + $0x380] sm:$0xf]
    %v299 = vld [vmem:[#allocation8 + $0x384] sm:$0xf]
    %v300 = vld [vmem:[#allocation8 + $0x388] sm:$0xf]
    %v301 = vld [vmem:[#allocation8 + $0x38c] sm:$0xf]
    %v302 = vld [vmem:[#allocation8 + $0x390] sm:$0xf]
    %v303 = vld [vmem:[#allocation8 + $0x394] sm:$0xf]
    %v304 = vld [vmem:[#allocation8 + $0x398] sm:$0xf]
    %v305 = vld [vmem:[#allocation8 + $0x39c] sm:$0xf]
    %v306 = vld [vmem:[#allocation8 + $0x3a0] sm:$0xf]
    %v307 = vld [vmem:[#allocation8 + $0x3a4] sm:$0xf]
    %v308 = vld [vmem:[#allocation8 + $0x3a8] sm:$0xf]
    %v309 = vld [vmem:[#allocation8 + $0x3ac] sm:$0xf]
    %v310 = vld [vmem:[#allocation8 + $0x3b0] sm:$0xf]
    %v311 = vld [vmem:[#allocation8 + $0x3b4] sm:$0xf]
    %v312 = vld [vmem:[#allocation8 + $0x3b8] sm:$0xf]
    %v313 = vld [vmem:[#allocation8 + $0x3bc] sm:$0xf]
    %v314 = vld [vmem:[#allocation8 + $0x3c0] sm:$0xf]
    %v315 = vld [vmem:[#allocation8 + $0x3c4] sm:$0xf]
    %v316 = vld [vmem:[#allocation8 + $0x3c8] sm:$0xf]
    %v317 = vld [vmem:[#allocation8 + $0x3cc] sm:$0xf]
    %v318 = vld [vmem:[#allocation8 + $0x3d0] sm:$0xf]
    %v319 = vld [vmem:[#allocation8 + $0x3d4] sm:$0xf]
    %v320 = vld [vmem:[#allocation8 + $0x3d8] sm:$0xf]
    %v321 = vld [vmem:[#allocation8 + $0x3dc] sm:$0xf]
    %v322 = vld [vmem:[#allocation8 + $0x3e0] sm:$0xf]
    %v323 = vld [vmem:[#allocation8 + $0x3e4] sm:$0xf]
    %v324 = vld [vmem:[#allocation8 + $0x3e8] sm:$0xf]
    %v325 = vld [vmem:[#allocation8 + $0x3ec] sm:$0xf]
    %v326 = vld [vmem:[#allocation8 + $0x3f0] sm:$0xf]
    %v327 = vld [vmem:[#allocation8 + $0x3f4] sm:$0xf]
    %v328 = vld [vmem:[#allocation8 + $0x3f8] sm:$0xf]
    %v329 = vld [vmem:[#allocation8 + $0x3fc] sm:$0xf]
    %v330 = vld [vmem:[#allocation8 + $0x400] sm:$0xf]
    %v331 = vld [vmem:[#allocation8 + $0x404] sm:$0xf]
    %v332 = vld [vmem:[#allocation8 + $0x408] sm:$0xf]
    %v333 = vld [vmem:[#allocation8 + $0x40c] sm:$0xf]
    %v334 = vld [vmem:[#allocation8 + $0x410] sm:$0xf]
    %v335 = vld [vmem:[#allocation8 + $0x414] sm:$0xf]
    %v336 = vld [vmem:[#allocation8 + $0x418] sm:$0xf]
    %v337 = vld [vmem:[#allocation8 + $0x41c] sm:$0xf]
    %v338 = vld [vmem:[#allocation8 + $0x420] sm:$0xf]
    %v339 = vld [vmem:[#allocation8 + $0x424] sm:$0xf]
    %v340 = vld [vmem:[#allocation8 + $0x428] sm:$0xf]
    %v341 = vld [vmem:[#allocation8 + $0x42c] sm:$0xf]
    %v342 = vld [vmem:[#allocation8 + $0x430] sm:$0xf]
    %v343 = vld [vmem:[#allocation8 + $0x434] sm:$0xf]
    %v344 = vld [vmem:[#allocation8 + $0x438] sm:$0xf]
    %v345 = vld [vmem:[#allocation8 + $0x43c] sm:$0xf]
    %v346 = vld [vmem:[#allocation8 + $0x440] sm:$0xf]
    %v347 = vld [vmem:[#allocation8 + $0x444] sm:$0xf]
    %v348 = vld [vmem:[#allocation8 + $0x448] sm:$0xf]
    %v349 = vld [vmem:[#allocation8 + $0x44c] sm:$0xf]
    %v350 = vld [vmem:[#allocation8 + $0x450] sm:$0xf]
    %v351 = vld [vmem:[#allocation8 + $0x454] sm:$0xf]
    %v352 = vld [vmem:[#allocation8 + $0x458] sm:$0xf]
    %v353 = vld [vmem:[#allocation8 + $0x45c] sm:$0xf]
    %v354 = vld [vmem:[#allocation8 + $0x460] sm:$0xf]
    %v355 = vld [vmem:[#allocation8 + $0x464] sm:$0xf]
    %v356 = vld [vmem:[#allocation8 + $0x468] sm:$0xf]
    %v357 = vld [vmem:[#allocation8 + $0x46c] sm:$0xf]
    %v358 = vld [vmem:[#allocation8 + $0x470] sm:$0xf]
    %v359 = vld [vmem:[#allocation8 + $0x474] sm:$0xf]
    %v360 = vld [vmem:[#allocation8 + $0x478] sm:$0xf]
    %v361 = vld [vmem:[#allocation8 + $0x47c] sm:$0xf]
    %v362 = vld [vmem:[#allocation8 + $0x480] sm:$0xf]
    %v363 = vld [vmem:[#allocation8 + $0x484] sm:$0xf]
    %v364 = vld [vmem:[#allocation8 + $0x488] sm:$0xf]
    %v365 = vld [vmem:[#allocation8 + $0x48c] sm:$0xf]
    %v366 = vld [vmem:[#allocation8 + $0x490] sm:$0xf]
    %v367 = vld [vmem:[#allocation8 + $0x494] sm:$0xf]
    %v368 = vld [vmem:[#allocation8 + $0x498] sm:$0xf]
    %v369 = vld [vmem:[#allocation8 + $0x49c] sm:$0xf]
    %v370 = vld [vmem:[#allocation8 + $0x4a0] sm:$0xf]
    %v371 = vld [vmem:[#allocation8 + $0x4a4] sm:$0xf]
    %v372 = vld [vmem:[#allocation8 + $0x4a8] sm:$0xf]
    %v373 = vld [vmem:[#allocation8 + $0x4ac] sm:$0xf]
    %v374 = vld [vmem:[#allocation8 + $0x4b0] sm:$0xf]
    %v375 = vld [vmem:[#allocation8 + $0x4b4] sm:$0xf]
    %v376 = vld [vmem:[#allocation8 + $0x4b8] sm:$0xf]
    %v377 = vld [vmem:[#allocation8 + $0x4bc] sm:$0xf]
    %v378 = vld [vmem:[#allocation8 + $0x4c0] sm:$0xf]
    %v379 = vld [vmem:[#allocation8 + $0x4c4] sm:$0xf]
    %v380 = vld [vmem:[#allocation8 + $0x4c8] sm:$0xf]
    %v381 = vld [vmem:[#allocation8 + $0x4cc] sm:$0xf]
    %v382 = vld [vmem:[#allocation8 + $0x4d0] sm:$0xf]
    %v383 = vld [vmem:[#allocation8 + $0x4d4] sm:$0xf]
    %v384 = vld [vmem:[#allocation8 + $0x4d8] sm:$0xf]
    %v385 = vld [vmem:[#allocation8 + $0x4dc] sm:$0xf]
    %v386 = vld [vmem:[#allocation8 + $0x4e0] sm:$0xf]
    %v387 = vld [vmem:[#allocation8 + $0x4e4] sm:$0xf]
    %v388 = vld [vmem:[#allocation8 + $0x4e8] sm:$0xf]
    %v389 = vld [vmem:[#allocation8 + $0x4ec] sm:$0xf]
    %v390 = vld [vmem:[#allocation8 + $0x4f0] sm:$0xf]
    %v391 = vld [vmem:[#allocation8 + $0x4f4] sm:$0xf]
    %v392 = vld [vmem:[#allocation8 + $0x4f8] sm:$0xf]
    %v393 = vld [vmem:[#allocation8 + $0x4fc] sm:$0xf]
    %v394 = vld [vmem:[#allocation8 + $0x500] sm:$0xf]
    %v395 = vld [vmem:[#allocation8 + $0x504] sm:$0xf]
    %v396 = vld [vmem:[#allocation8 + $0x508] sm:$0xf]
    %v397 = vld [vmem:[#allocation8 + $0x50c] sm:$0xf]
    %v398 = vld [vmem:[#allocation8 + $0x510] sm:$0xf]
    %v399 = vld [vmem:[#allocation8 + $0x514] sm:$0xf]
    %v400 = vld [vmem:[#allocation8 + $0x518] sm:$0xf]
    %v401 = vld [vmem:[#allocation8 + $0x51c] sm:$0xf]
    %v402 = vld [vmem:[#allocation8 + $0x520] sm:$0xf]
    %v403 = vld [vmem:[#allocation8 + $0x524] sm:$0xf]
    %v404 = vld [vmem:[#allocation8 + $0x528] sm:$0xf]
    %v405 = vld [vmem:[#allocation8 + $0x52c] sm:$0xf]
    %v406 = vld [vmem:[#allocation8 + $0x530] sm:$0xf]
    %v407 = vld [vmem:[#allocation8 + $0x534] sm:$0xf]
    %v408 = vld [vmem:[#allocation8 + $0x538] sm:$0xf]
    %v409 = vld [vmem:[#allocation8 + $0x53c] sm:$0xf]
    %v410 = vld [vmem:[#allocation8 + $0x540] sm:$0xf]
    %v411 = vld [vmem:[#allocation8 + $0x544] sm:$0xf]
    %v412 = vld [vmem:[#allocation8 + $0x548] sm:$0xf]
    %v413 = vld [vmem:[#allocation8 + $0x54c] sm:$0xf]
    %v414 = vld [vmem:[#allocation8 + $0x550] sm:$0xf]
    %v415 = vld [vmem:[#allocation8 + $0x554] sm:$0xf]
    %v416 = vld [vmem:[#allocation8 + $0x558] sm:$0xf]
    %v417 = vld [vmem:[#allocation8 + $0x55c] sm:$0xf]
    %v418 = vld [vmem:[#allocation8 + $0x560] sm:$0xf]
    %v419 = vld [vmem:[#allocation8 + $0x564] sm:$0xf]
    %v420 = vld [vmem:[#allocation8 + $0x568] sm:$0xf]
    %v421 = vld [vmem:[#allocation8 + $0x56c] sm:$0xf]
    %v422 = vld [vmem:[#allocation8 + $0x570] sm:$0xf]
    %v423 = vld [vmem:[#allocation8 + $0x574] sm:$0xf]
    %v424 = vld [vmem:[#allocation8 + $0x578] sm:$0xf]
    %v425 = vld [vmem:[#allocation8 + $0x57c] sm:$0xf]
    %v426 = vld [vmem:[%s4] sm:$0x1]
    %v427 = vld [vmem:[%s4 + $0x1] sm:$0x1]
    %v428 = vld [vmem:[#allocation5] sm:$0xff]
    %v429 = vld [vmem:[#allocation5 + $0x8] sm:$0xff]
    %v430 = vld [vmem:[#allocation5 + $0x10] sm:$0xff]
    %v431 = vld [vmem:[#allocation5 + $0x18] sm:$0xff]
    %v432 = vld [vmem:[#allocation5 + $0x20] sm:$0xff]
    %v433 = vld [vmem:[#allocation5 + $0x28] sm:$0xff]
    %v434 = vld [vmem:[#allocation7] sm:$0xff]
    %v435 = vld [vmem:[#allocation7 + $0x8] sm:$0xff]
    %v436 = vld [vmem:[#allocation7 + $0x10] sm:$0xff]
    %v437 = vld [vmem:[#allocation7 + $0x18] sm:$0xff]
    %v438 = vld [vmem:[#allocation7 + $0x20] sm:$0xff]
    %v439 = vld [vmem:[#allocation7 + $0x28] sm:$0xff]
    %v440 = vadd.f32 %v428, %v434
    %v441 = vadd.f32 %v429, %v435
    %v442 = vadd.f32 %v430, %v436
    %v443 = vadd.f32 %v431, %v437
    %v444 = vadd.f32 %v432, %v438
    %v445 = vadd.f32 %v433, %v439
    %v446 = vld [vmem:[#allocation3] sm:$0xff]
    %v447 = vld [vmem:[#allocation3 + $0x8] sm:$0xff]
    %v448 = vld [vmem:[#allocation3 + $0x10] sm:$0xff]
    %v449 = vld [vmem:[#allocation3 + $0x18] sm:$0xff]
    %v450 = vld [vmem:[#allocation3 + $0x20] sm:$0xff]
    %v451 = vld [vmem:[#allocation3 + $0x28] sm:$0xff]
    %v452 = vld [vmem:[#allocation3 + $0x30] sm:$0xff]
    %v453 = vld [vmem:[#allocation3 + $0x38] sm:$0xff]
    %v454 = vld [vmem:[#allocation3 + $0x40] sm:$0xff]
    %v455 = vld [vmem:[#allocation3 + $0x48] sm:$0xff]
    %v456 = vld [vmem:[#allocation3 + $0x50] sm:$0xff]
    %v457 = vld [vmem:[#allocation3 + $0x58] sm:$0xff]
    %v458 = vld [vmem:[#allocation3 + $0x60] sm:$0xff]
    %v459 = vld [vmem:[#allocation3 + $0x68] sm:$0xff]
    %v460 = vld [vmem:[#allocation3 + $0x70] sm:$0xff]
    %v461 = vld [vmem:[#allocation3 + $0x78] sm:$0xff]
    %v462 = vpack.c.bf16 %v446, %v446
    %v463 = vpack.c.bf16 %v447, %v447
    %v464 = vpack.c.bf16 %v448, %v448
    %v465 = vpack.c.bf16 %v449, %v449
    %v466 = vpack.c.bf16 %v450, %v450
    %v467 = vpack.c.bf16 %v451, %v451
    %v468 = vpack.c.bf16 %v452, %v452
    %v469 = vpack.c.bf16 %v453, %v453
    %v470 = vpack.c.bf16 %v454, %v454
    %v471 = vpack.c.bf16 %v455, %v455
    %v472 = vpack.c.bf16 %v456, %v456
    %v473 = vpack.c.bf16 %v457, %v457
    %v474 = vpack.c.bf16 %v458, %v458
    %v475 = vpack.c.bf16 %v459, %v459
    %v476 = vpack.c.bf16 %v460, %v460
    %v477 = vpack.c.bf16 %v461, %v461
    %v478 = vpack.c.bf16 %v440, %v440
    %v479 = vpack.c.bf16 %v441, %v441
    %v480 = vpack.c.bf16 %v442, %v442
    %v481 = vpack.c.bf16 %v443, %v443
    %v482 = vpack.c.bf16 %v444, %v444
    %v483 = vpack.c.bf16 %v445, %v445
    %v580 = vunpack.c.l.b16 %v330
    %v581 = vunpack.c.l.b16 %v331
    %v582 = vunpack.c.l.b16 %v332
    %v583 = vunpack.c.l.b16 %v333
    %v584 = vunpack.c.l.b16 %v334
    %v585 = vunpack.c.l.b16 %v335
    %v586 = vunpack.c.l.b16 %v336
    %v587 = vunpack.c.l.b16 %v337
    %v588 = vunpack.c.l.b16 %v338
    %v589 = vunpack.c.l.b16 %v339
    %v590 = vunpack.c.l.b16 %v340
    %v591 = vunpack.c.l.b16 %v341
    %v592 = vunpack.c.l.b16 %v342
    %v593 = vunpack.c.l.b16 %v343
    %v594 = vunpack.c.l.b16 %v344
    %v595 = vunpack.c.l.b16 %v345
    %v596 = vunpack.c.l.b16 %v346
    %v597 = vunpack.c.l.b16 %v347
    %v598 = vunpack.c.l.b16 %v348
    %v599 = vunpack.c.l.b16 %v349
    %v600 = vunpack.c.l.b16 %v350
    %v601 = vunpack.c.l.b16 %v351
    %v602 = vunpack.c.l.b16 %v352
    %v603 = vunpack.c.l.b16 %v353
    %v604 = vunpack.c.l.b16 %v354
    %v605 = vunpack.c.l.b16 %v355
    %v606 = vunpack.c.l.b16 %v356
    %v607 = vunpack.c.l.b16 %v357
    %v608 = vunpack.c.l.b16 %v358
    %v609 = vunpack.c.l.b16 %v359
    %v610 = vunpack.c.l.b16 %v360
    %v611 = vunpack.c.l.b16 %v361
    %v612 = vunpack.c.l.b16 %v362
    %v613 = vunpack.c.l.b16 %v363
    %v614 = vunpack.c.l.b16 %v364
    %v615 = vunpack.c.l.b16 %v365
    %v616 = vunpack.c.l.b16 %v366
    %v617 = vunpack.c.l.b16 %v367
    %v618 = vunpack.c.l.b16 %v368
    %v619 = vunpack.c.l.b16 %v369
    %v620 = vunpack.c.l.b16 %v370
    %v621 = vunpack.c.l.b16 %v371
    %v622 = vunpack.c.l.b16 %v372
    %v623 = vunpack.c.l.b16 %v373
    %v624 = vunpack.c.l.b16 %v374
    %v625 = vunpack.c.l.b16 %v375
    %v626 = vunpack.c.l.b16 %v376
    %v627 = vunpack.c.l.b16 %v377
    %v628 = vunpack.c.l.b16 %v378
    %v629 = vunpack.c.l.b16 %v379
    %v630 = vunpack.c.l.b16 %v380
    %v631 = vunpack.c.l.b16 %v381
    %v632 = vunpack.c.l.b16 %v382
    %v633 = vunpack.c.l.b16 %v383
    %v634 = vunpack.c.l.b16 %v384
    %v635 = vunpack.c.l.b16 %v385
    %v636 = vunpack.c.l.b16 %v386
    %v637 = vunpack.c.l.b16 %v387
    %v638 = vunpack.c.l.b16 %v388
    %v639 = vunpack.c.l.b16 %v389
    %v640 = vunpack.c.l.b16 %v390
    %v641 = vunpack.c.l.b16 %v391
    %v642 = vunpack.c.l.b16 %v392
    %v643 = vunpack.c.l.b16 %v393
    %v644 = vunpack.c.l.b16 %v394
    %v645 = vunpack.c.l.b16 %v395
    %v646 = vunpack.c.l.b16 %v396
    %v647 = vunpack.c.l.b16 %v397
    %v648 = vunpack.c.l.b16 %v398
    %v649 = vunpack.c.l.b16 %v399
    %v650 = vunpack.c.l.b16 %v400
    %v651 = vunpack.c.l.b16 %v401
    %v652 = vunpack.c.l.b16 %v402
    %v653 = vunpack.c.l.b16 %v403
    %v654 = vunpack.c.l.b16 %v404
    %v655 = vunpack.c.l.b16 %v405
    %v656 = vunpack.c.l.b16 %v406
    %v657 = vunpack.c.l.b16 %v407
    %v658 = vunpack.c.l.b16 %v408
    %v659 = vunpack.c.l.b16 %v409
    %v660 = vunpack.c.l.b16 %v410
    %v661 = vunpack.c.l.b16 %v411
    %v662 = vunpack.c.l.b16 %v412
    %v663 = vunpack.c.l.b16 %v413
    %v664 = vunpack.c.l.b16 %v414
    %v665 = vunpack.c.l.b16 %v415
    %v666 = vunpack.c.l.b16 %v416
    %v667 = vunpack.c.l.b16 %v417
    %v668 = vunpack.c.l.b16 %v418
    %v669 = vunpack.c.l.b16 %v419
    %v670 = vunpack.c.l.b16 %v420
    %v671 = vunpack.c.l.b16 %v421
    %v672 = vunpack.c.l.b16 %v422
    %v673 = vunpack.c.l.b16 %v423
    %v674 = vunpack.c.l.b16 %v424
    %v675 = vunpack.c.l.b16 %v425
    %v676 = vpack.c.b16 %v581, %v580
    %v677 = vpack.c.b16 %v583, %v582
    %v678 = vpack.c.b16 %v585, %v584
    %v679 = vpack.c.b16 %v587, %v586
    %v680 = vpack.c.b16 %v589, %v588
    %v681 = vpack.c.b16 %v591, %v590
    %v682 = vpack.c.b16 %v593, %v592
    %v683 = vpack.c.b16 %v595, %v594
    %v684 = vpack.c.b16 %v597, %v596
    %v685 = vpack.c.b16 %v599, %v598
    %v686 = vpack.c.b16 %v601, %v600
    %v687 = vpack.c.b16 %v603, %v602
    %v688 = vpack.c.b16 %v605, %v604
    %v689 = vpack.c.b16 %v607, %v606
    %v690 = vpack.c.b16 %v609, %v608
    %v691 = vpack.c.b16 %v611, %v610
    %v692 = vpack.c.b16 %v613, %v612
    %v693 = vpack.c.b16 %v615, %v614
    %v694 = vpack.c.b16 %v617, %v616
    %v695 = vpack.c.b16 %v619, %v618
    %v696 = vpack.c.b16 %v621, %v620
    %v697 = vpack.c.b16 %v623, %v622
    %v698 = vpack.c.b16 %v625, %v624
    %v699 = vpack.c.b16 %v627, %v626
    %v700 = vpack.c.b16 %v629, %v628
    %v701 = vpack.c.b16 %v631, %v630
    %v702 = vpack.c.b16 %v633, %v632
    %v703 = vpack.c.b16 %v635, %v634
    %v704 = vpack.c.b16 %v637, %v636
    %v705 = vpack.c.b16 %v639, %v638
    %v706 = vpack.c.b16 %v641, %v640
    %v707 = vpack.c.b16 %v643, %v642
    %v708 = vpack.c.b16 %v645, %v644
    %v709 = vpack.c.b16 %v647, %v646
    %v710 = vpack.c.b16 %v649, %v648
    %v711 = vpack.c.b16 %v651, %v650
    %v712 = vpack.c.b16 %v653, %v652
    %v713 = vpack.c.b16 %v655, %v654
    %v714 = vpack.c.b16 %v657, %v656
    %v715 = vpack.c.b16 %v659, %v658
    %v716 = vpack.c.b16 %v661, %v660
    %v717 = vpack.c.b16 %v663, %v662
    %v718 = vpack.c.b16 %v665, %v664
    %v719 = vpack.c.b16 %v667, %v666
    %v720 = vpack.c.b16 %v669, %v668
    %v721 = vpack.c.b16 %v671, %v670
    %v722 = vpack.c.b16 %v673, %v672
    %v723 = vpack.c.b16 %v675, %v674
    %772 = vmatprep.subr.bf16.mxu0 0
    %773 = vmatpush1.bf16.msra.mxu0 %v683
    %774 = vmatprep.subr.bf16.mxu0 0
    %775 = vmatpush1.bf16.msra.mxu0 %v682
    %776 = vmatprep.subr.bf16.mxu0 0
    %777 = vmatpush1.bf16.msra.mxu0 %v681
    %778 = vmatprep.subr.bf16.mxu0 0
    %779 = vmatpush1.bf16.msra.mxu0 %v680
    %780 = vmatprep.subr.bf16.mxu0 0
    %781 = vmatpush1.bf16.msra.mxu0 %v679
    %782 = vmatprep.subr.bf16.mxu0 0
    %783 = vmatpush1.bf16.msra.mxu0 %v678
    %784 = vmatprep.subr.bf16.mxu0 0
    %785 = vmatpush1.bf16.msra.mxu0 %v677
    %786 = vmatprep.subr.bf16.mxu0 0
    %787 = vmatpush1.bf16.msra.mxu0 %v676
    %788 = vmatprep.subr.bf16.mxu0 0
    %789 = vmatpush2.bf16.msra.mxu0 %v691
    %790 = vmatprep.subr.bf16.mxu0 0
    %791 = vmatpush2.bf16.msra.mxu0 %v690
    %792 = vmatprep.subr.bf16.mxu0 0
    %793 = vmatpush2.bf16.msra.mxu0 %v689
    %794 = vmatprep.subr.bf16.mxu0 0
    %795 = vmatpush2.bf16.msra.mxu0 %v688
    %796 = vmatprep.subr.bf16.mxu0 0
    %797 = vmatpush2.bf16.msra.mxu0 %v687
    %798 = vmatprep.subr.bf16.mxu0 0
    %799 = vmatpush2.bf16.msra.mxu0 %v686
    %800 = vmatprep.subr.bf16.mxu0 0
    %801 = vmatpush2.bf16.msra.mxu0 %v685
    %802 = vmatprep.subr.bf16.mxu0 0
    %803 = vmatpush2.bf16.msra.mxu0 %v684
    %804 = vmatprep.mubr.bf16.mxu0 %v479
    %805 = vmatmul.mubr.bf16.gmra.mxu0 %v478
    %v806 = vpop.f32.mrf.mxu0
    %v807 = vadd.f32 0.0, %v806
    %v808 = vpop.f32.mrf.mxu0
    %v809 = vpop.f32.mrf.mxu0
    %v810 = vpop.f32.mrf.mxu0
    %811 = vdwg.mxu0
    %812 = vmatprep.subr.bf16.mxu0 0
    %813 = vmatpush1.bf16.msra.mxu0 %v699
    %814 = vmatprep.subr.bf16.mxu0 0
    %815 = vmatpush1.bf16.msra.mxu0 %v698
    %816 = vmatprep.subr.bf16.mxu0 0
    %817 = vmatpush1.bf16.msra.mxu0 %v697
    %818 = vmatprep.subr.bf16.mxu0 0
    %819 = vmatpush1.bf16.msra.mxu0 %v696
    %820 = vmatprep.subr.bf16.mxu0 0
    %821 = vmatpush1.bf16.msra.mxu0 %v695
    %822 = vmatprep.subr.bf16.mxu0 0
    %823 = vmatpush1.bf16.msra.mxu0 %v694
    %824 = vmatprep.subr.bf16.mxu0 0
    %825 = vmatpush1.bf16.msra.mxu0 %v693
    %826 = vmatprep.subr.bf16.mxu0 0
    %827 = vmatpush1.bf16.msra.mxu0 %v692
    %828 = vmatprep.subr.bf16.mxu0 0
    %829 = vmatpush2.bf16.msra.mxu0 %v707
    %830 = vmatprep.subr.bf16.mxu0 0
    %831 = vmatpush2.bf16.msra.mxu0 %v706
    %832 = vmatprep.subr.bf16.mxu0 0
    %833 = vmatpush2.bf16.msra.mxu0 %v705
    %834 = vmatprep.subr.bf16.mxu0 0
    %835 = vmatpush2.bf16.msra.mxu0 %v704
    %836 = vmatprep.subr.bf16.mxu0 0
    %837 = vmatpush2.bf16.msra.mxu0 %v703
    %838 = vmatprep.subr.bf16.mxu0 0
    %839 = vmatpush2.bf16.msra.mxu0 %v702
    %840 = vmatprep.subr.bf16.mxu0 0
    %841 = vmatpush2.bf16.msra.mxu0 %v701
    %842 = vmatprep.subr.bf16.mxu0 0
    %843 = vmatpush2.bf16.msra.mxu0 %v700
    %844 = vmatprep.mubr.bf16.mxu0 %v481
    %845 = vmatmul.mubr.bf16.gmra.mxu0 %v480
    %v846 = vpop.f32.mrf.mxu0
    %v847 = vadd.f32 %v807, %v846
    %v848 = vpop.f32.mrf.mxu0
    %v849 = vpop.f32.mrf.mxu0
    %v850 = vpop.f32.mrf.mxu0
    %851 = vdwg.mxu0
    %852 = vmatprep.subr.bf16.mxu0 0
    %853 = vmatpush1.bf16.msra.mxu0 %v715
    %854 = vmatprep.subr.bf16.mxu0 0
    %855 = vmatpush1.bf16.msra.mxu0 %v714
    %856 = vmatprep.subr.bf16.mxu0 0
    %857 = vmatpush1.bf16.msra.mxu0 %v713
    %858 = vmatprep.subr.bf16.mxu0 0
    %859 = vmatpush1.bf16.msra.mxu0 %v712
    %860 = vmatprep.subr.bf16.mxu0 0
    %861 = vmatpush1.bf16.msra.mxu0 %v711
    %862 = vmatprep.subr.bf16.mxu0 0
    %863 = vmatpush1.bf16.msra.mxu0 %v710
    %864 = vmatprep.subr.bf16.mxu0 0
    %865 = vmatpush1.bf16.msra.mxu0 %v709
    %866 = vmatprep.subr.bf16.mxu0 0
    %867 = vmatpush1.bf16.msra.mxu0 %v708
    %868 = vmatprep.subr.bf16.mxu0 0
    %869 = vmatpush2.bf16.msra.mxu0 %v723
    %870 = vmatprep.subr.bf16.mxu0 0
    %871 = vmatpush2.bf16.msra.mxu0 %v722
    %872 = vmatprep.subr.bf16.mxu0 0
    %873 = vmatpush2.bf16.msra.mxu0 %v721
    %874 = vmatprep.subr.bf16.mxu0 0
    %875 = vmatpush2.bf16.msra.mxu0 %v720
    %876 = vmatprep.subr.bf16.mxu0 0
    %877 = vmatpush2.bf16.msra.mxu0 %v719
    %878 = vmatprep.subr.bf16.mxu0 0
    %879 = vmatpush2.bf16.msra.mxu0 %v718
    %880 = vmatprep.subr.bf16.mxu0 0
    %881 = vmatpush2.bf16.msra.mxu0 %v717
    %882 = vmatprep.subr.bf16.mxu0 0
    %883 = vmatpush2.bf16.msra.mxu0 %v716
    %884 = vmatprep.mubr.bf16.mxu0 %v483
    %885 = vmatmul.mubr.bf16.gmra.mxu0 %v482
    %v886 = vpop.f32.mrf.mxu0
    %v887 = vadd.f32 %v847, %v886
    %v888 = vpop.f32.mrf.mxu0
    %v889 = vpop.f32.mrf.mxu0
    %v890 = vpop.f32.mrf.mxu0
    %891 = vdwg.mxu0
    %v1148 = vunpack.c.l.b16 %v74
    %v1149 = vunpack.c.l.b16 %v75
    %v1150 = vunpack.c.l.b16 %v76
    %v1151 = vunpack.c.l.b16 %v77
    %v1152 = vunpack.c.l.b16 %v78
    %v1153 = vunpack.c.l.b16 %v79
    %v1154 = vunpack.c.l.b16 %v80
    %v1155 = vunpack.c.l.b16 %v81
    %v1156 = vunpack.c.l.b16 %v82
    %v1157 = vunpack.c.l.b16 %v83
    %v1158 = vunpack.c.l.b16 %v84
    %v1159 = vunpack.c.l.b16 %v85
    %v1160 = vunpack.c.l.b16 %v86
    %v1161 = vunpack.c.l.b16 %v87
    %v1162 = vunpack.c.l.b16 %v88
    %v1163 = vunpack.c.l.b16 %v89
    %v1164 = vunpack.c.l.b16 %v90
    %v1165 = vunpack.c.l.b16 %v91
    %v1166 = vunpack.c.l.b16 %v92
    %v1167 = vunpack.c.l.b16 %v93
    %v1168 = vunpack.c.l.b16 %v94
    %v1169 = vunpack.c.l.b16 %v95
    %v1170 = vunpack.c.l.b16 %v96
    %v1171 = vunpack.c.l.b16 %v97
    %v1172 = vunpack.c.l.b16 %v98
    %v1173 = vunpack.c.l.b16 %v99
    %v1174 = vunpack.c.l.b16 %v100
    %v1175 = vunpack.c.l.b16 %v101
    %v1176 = vunpack.c.l.b16 %v102
    %v1177 = vunpack.c.l.b16 %v103
    %v1178 = vunpack.c.l.b16 %v104
    %v1179 = vunpack.c.l.b16 %v105
    %v1180 = vunpack.c.l.b16 %v106
    %v1181 = vunpack.c.l.b16 %v107
    %v1182 = vunpack.c.l.b16 %v108
    %v1183 = vunpack.c.l.b16 %v109
    %v1184 = vunpack.c.l.b16 %v110
    %v1185 = vunpack.c.l.b16 %v111
    %v1186 = vunpack.c.l.b16 %v112
    %v1187 = vunpack.c.l.b16 %v113
    %v1188 = vunpack.c.l.b16 %v114
    %v1189 = vunpack.c.l.b16 %v115
    %v1190 = vunpack.c.l.b16 %v116
    %v1191 = vunpack.c.l.b16 %v117
    %v1192 = vunpack.c.l.b16 %v118
    %v1193 = vunpack.c.l.b16 %v119
    %v1194 = vunpack.c.l.b16 %v120
    %v1195 = vunpack.c.l.b16 %v121
    %v1196 = vunpack.c.l.b16 %v122
    %v1197 = vunpack.c.l.b16 %v123
    %v1198 = vunpack.c.l.b16 %v124
    %v1199 = vunpack.c.l.b16 %v125
    %v1200 = vunpack.c.l.b16 %v126
    %v1201 = vunpack.c.l.b16 %v127
    %v1202 = vunpack.c.l.b16 %v128
    %v1203 = vunpack.c.l.b16 %v129
    %v1204 = vunpack.c.l.b16 %v130
    %v1205 = vunpack.c.l.b16 %v131
    %v1206 = vunpack.c.l.b16 %v132
    %v1207 = vunpack.c.l.b16 %v133
    %v1208 = vunpack.c.l.b16 %v134
    %v1209 = vunpack.c.l.b16 %v135
    %v1210 = vunpack.c.l.b16 %v136
    %v1211 = vunpack.c.l.b16 %v137
    %v1212 = vunpack.c.l.b16 %v138
    %v1213 = vunpack.c.l.b16 %v139
    %v1214 = vunpack.c.l.b16 %v140
    %v1215 = vunpack.c.l.b16 %v141
    %v1216 = vunpack.c.l.b16 %v142
    %v1217 = vunpack.c.l.b16 %v143
    %v1218 = vunpack.c.l.b16 %v144
    %v1219 = vunpack.c.l.b16 %v145
    %v1220 = vunpack.c.l.b16 %v146
    %v1221 = vunpack.c.l.b16 %v147
    %v1222 = vunpack.c.l.b16 %v148
    %v1223 = vunpack.c.l.b16 %v149
    %v1224 = vunpack.c.l.b16 %v150
    %v1225 = vunpack.c.l.b16 %v151
    %v1226 = vunpack.c.l.b16 %v152
    %v1227 = vunpack.c.l.b16 %v153
    %v1228 = vunpack.c.l.b16 %v154
    %v1229 = vunpack.c.l.b16 %v155
    %v1230 = vunpack.c.l.b16 %v156
    %v1231 = vunpack.c.l.b16 %v157
    %v1232 = vunpack.c.l.b16 %v158
    %v1233 = vunpack.c.l.b16 %v159
    %v1234 = vunpack.c.l.b16 %v160
    %v1235 = vunpack.c.l.b16 %v161
    %v1236 = vunpack.c.l.b16 %v162
    %v1237 = vunpack.c.l.b16 %v163
    %v1238 = vunpack.c.l.b16 %v164
    %v1239 = vunpack.c.l.b16 %v165
    %v1240 = vunpack.c.l.b16 %v166
    %v1241 = vunpack.c.l.b16 %v167
    %v1242 = vunpack.c.l.b16 %v168
    %v1243 = vunpack.c.l.b16 %v169
    %v1244 = vunpack.c.l.b16 %v170
    %v1245 = vunpack.c.l.b16 %v171
    %v1246 = vunpack.c.l.b16 %v172
    %v1247 = vunpack.c.l.b16 %v173
    %v1248 = vunpack.c.l.b16 %v174
    %v1249 = vunpack.c.l.b16 %v175
    %v1250 = vunpack.c.l.b16 %v176
    %v1251 = vunpack.c.l.b16 %v177
    %v1252 = vunpack.c.l.b16 %v178
    %v1253 = vunpack.c.l.b16 %v179
    %v1254 = vunpack.c.l.b16 %v180
    %v1255 = vunpack.c.l.b16 %v181
    %v1256 = vunpack.c.l.b16 %v182
    %v1257 = vunpack.c.l.b16 %v183
    %v1258 = vunpack.c.l.b16 %v184
    %v1259 = vunpack.c.l.b16 %v185
    %v1260 = vunpack.c.l.b16 %v186
    %v1261 = vunpack.c.l.b16 %v187
    %v1262 = vunpack.c.l.b16 %v188
    %v1263 = vunpack.c.l.b16 %v189
    %v1264 = vunpack.c.l.b16 %v190
    %v1265 = vunpack.c.l.b16 %v191
    %v1266 = vunpack.c.l.b16 %v192
    %v1267 = vunpack.c.l.b16 %v193
    %v1268 = vunpack.c.l.b16 %v194
    %v1269 = vunpack.c.l.b16 %v195
    %v1270 = vunpack.c.l.b16 %v196
    %v1271 = vunpack.c.l.b16 %v197
    %v1272 = vunpack.c.l.b16 %v198
    %v1273 = vunpack.c.l.b16 %v199
    %v1274 = vunpack.c.l.b16 %v200
    %v1275 = vunpack.c.l.b16 %v201
    %v1276 = vunpack.c.l.b16 %v202
    %v1277 = vunpack.c.l.b16 %v203
    %v1278 = vunpack.c.l.b16 %v204
    %v1279 = vunpack.c.l.b16 %v205
    %v1280 = vunpack.c.l.b16 %v206
    %v1281 = vunpack.c.l.b16 %v207
    %v1282 = vunpack.c.l.b16 %v208
    %v1283 = vunpack.c.l.b16 %v209
    %v1284 = vunpack.c.l.b16 %v210
    %v1285 = vunpack.c.l.b16 %v211
    %v1286 = vunpack.c.l.b16 %v212
    %v1287 = vunpack.c.l.b16 %v213
    %v1288 = vunpack.c.l.b16 %v214
    %v1289 = vunpack.c.l.b16 %v215
    %v1290 = vunpack.c.l.b16 %v216
    %v1291 = vunpack.c.l.b16 %v217
    %v1292 = vunpack.c.l.b16 %v218
    %v1293 = vunpack.c.l.b16 %v219
    %v1294 = vunpack.c.l.b16 %v220
    %v1295 = vunpack.c.l.b16 %v221
    %v1296 = vunpack.c.l.b16 %v222
    %v1297 = vunpack.c.l.b16 %v223
    %v1298 = vunpack.c.l.b16 %v224
    %v1299 = vunpack.c.l.b16 %v225
    %v1300 = vunpack.c.l.b16 %v226
    %v1301 = vunpack.c.l.b16 %v227
    %v1302 = vunpack.c.l.b16 %v228
    %v1303 = vunpack.c.l.b16 %v229
    %v1304 = vunpack.c.l.b16 %v230
    %v1305 = vunpack.c.l.b16 %v231
    %v1306 = vunpack.c.l.b16 %v232
    %v1307 = vunpack.c.l.b16 %v233
    %v1308 = vunpack.c.l.b16 %v234
    %v1309 = vunpack.c.l.b16 %v235
    %v1310 = vunpack.c.l.b16 %v236
    %v1311 = vunpack.c.l.b16 %v237
    %v1312 = vunpack.c.l.b16 %v238
    %v1313 = vunpack.c.l.b16 %v239
    %v1314 = vunpack.c.l.b16 %v240
    %v1315 = vunpack.c.l.b16 %v241
    %v1316 = vunpack.c.l.b16 %v242
    %v1317 = vunpack.c.l.b16 %v243
    %v1318 = vunpack.c.l.b16 %v244
    %v1319 = vunpack.c.l.b16 %v245
    %v1320 = vunpack.c.l.b16 %v246
    %v1321 = vunpack.c.l.b16 %v247
    %v1322 = vunpack.c.l.b16 %v248
    %v1323 = vunpack.c.l.b16 %v249
    %v1324 = vunpack.c.l.b16 %v250
    %v1325 = vunpack.c.l.b16 %v251
    %v1326 = vunpack.c.l.b16 %v252
    %v1327 = vunpack.c.l.b16 %v253
    %v1328 = vunpack.c.l.b16 %v254
    %v1329 = vunpack.c.l.b16 %v255
    %v1330 = vunpack.c.l.b16 %v256
    %v1331 = vunpack.c.l.b16 %v257
    %v1332 = vunpack.c.l.b16 %v258
    %v1333 = vunpack.c.l.b16 %v259
    %v1334 = vunpack.c.l.b16 %v260
    %v1335 = vunpack.c.l.b16 %v261
    %v1336 = vunpack.c.l.b16 %v262
    %v1337 = vunpack.c.l.b16 %v263
    %v1338 = vunpack.c.l.b16 %v264
    %v1339 = vunpack.c.l.b16 %v265
    %v1340 = vunpack.c.l.b16 %v266
    %v1341 = vunpack.c.l.b16 %v267
    %v1342 = vunpack.c.l.b16 %v268
    %v1343 = vunpack.c.l.b16 %v269
    %v1344 = vunpack.c.l.b16 %v270
    %v1345 = vunpack.c.l.b16 %v271
    %v1346 = vunpack.c.l.b16 %v272
    %v1347 = vunpack.c.l.b16 %v273
    %v1348 = vunpack.c.l.b16 %v274
    %v1349 = vunpack.c.l.b16 %v275
    %v1350 = vunpack.c.l.b16 %v276
    %v1351 = vunpack.c.l.b16 %v277
    %v1352 = vunpack.c.l.b16 %v278
    %v1353 = vunpack.c.l.b16 %v279
    %v1354 = vunpack.c.l.b16 %v280
    %v1355 = vunpack.c.l.b16 %v281
    %v1356 = vunpack.c.l.b16 %v282
    %v1357 = vunpack.c.l.b16 %v283
    %v1358 = vunpack.c.l.b16 %v284
    %v1359 = vunpack.c.l.b16 %v285
    %v1360 = vunpack.c.l.b16 %v286
    %v1361 = vunpack.c.l.b16 %v287
    %v1362 = vunpack.c.l.b16 %v288
    %v1363 = vunpack.c.l.b16 %v289
    %v1364 = vunpack.c.l.b16 %v290
    %v1365 = vunpack.c.l.b16 %v291
    %v1366 = vunpack.c.l.b16 %v292
    %v1367 = vunpack.c.l.b16 %v293
    %v1368 = vunpack.c.l.b16 %v294
    %v1369 = vunpack.c.l.b16 %v295
    %v1370 = vunpack.c.l.b16 %v296
    %v1371 = vunpack.c.l.b16 %v297
    %v1372 = vunpack.c.l.b16 %v298
    %v1373 = vunpack.c.l.b16 %v299
    %v1374 = vunpack.c.l.b16 %v300
    %v1375 = vunpack.c.l.b16 %v301
    %v1376 = vunpack.c.l.b16 %v302
    %v1377 = vunpack.c.l.b16 %v303
    %v1378 = vunpack.c.l.b16 %v304
    %v1379 = vunpack.c.l.b16 %v305
    %v1380 = vunpack.c.l.b16 %v306
    %v1381 = vunpack.c.l.b16 %v307
    %v1382 = vunpack.c.l.b16 %v308
    %v1383 = vunpack.c.l.b16 %v309
    %v1384 = vunpack.c.l.b16 %v310
    %v1385 = vunpack.c.l.b16 %v311
    %v1386 = vunpack.c.l.b16 %v312
    %v1387 = vunpack.c.l.b16 %v313
    %v1388 = vunpack.c.l.b16 %v314
    %v1389 = vunpack.c.l.b16 %v315
    %v1390 = vunpack.c.l.b16 %v316
    %v1391 = vunpack.c.l.b16 %v317
    %v1392 = vunpack.c.l.b16 %v318
    %v1393 = vunpack.c.l.b16 %v319
    %v1394 = vunpack.c.l.b16 %v320
    %v1395 = vunpack.c.l.b16 %v321
    %v1396 = vunpack.c.l.b16 %v322
    %v1397 = vunpack.c.l.b16 %v323
    %v1398 = vunpack.c.l.b16 %v324
    %v1399 = vunpack.c.l.b16 %v325
    %v1400 = vunpack.c.l.b16 %v326
    %v1401 = vunpack.c.l.b16 %v327
    %v1402 = vunpack.c.l.b16 %v328
    %v1403 = vunpack.c.l.b16 %v329
    %v1404 = vpack.c.b16 %v1149, %v1148
    %v1405 = vpack.c.b16 %v1151, %v1150
    %v1406 = vpack.c.b16 %v1153, %v1152
    %v1407 = vpack.c.b16 %v1155, %v1154
    %v1408 = vpack.c.b16 %v1157, %v1156
    %v1409 = vpack.c.b16 %v1159, %v1158
    %v1410 = vpack.c.b16 %v1161, %v1160
    %v1411 = vpack.c.b16 %v1163, %v1162
    %v1412 = vpack.c.b16 %v1165, %v1164
    %v1413 = vpack.c.b16 %v1167, %v1166
    %v1414 = vpack.c.b16 %v1169, %v1168
    %v1415 = vpack.c.b16 %v1171, %v1170
    %v1416 = vpack.c.b16 %v1173, %v1172
    %v1417 = vpack.c.b16 %v1175, %v1174
    %v1418 = vpack.c.b16 %v1177, %v1176
    %v1419 = vpack.c.b16 %v1179, %v1178
    %v1420 = vpack.c.b16 %v1181, %v1180
    %v1421 = vpack.c.b16 %v1183, %v1182
    %v1422 = vpack.c.b16 %v1185, %v1184
    %v1423 = vpack.c.b16 %v1187, %v1186
    %v1424 = vpack.c.b16 %v1189, %v1188
    %v1425 = vpack.c.b16 %v1191, %v1190
    %v1426 = vpack.c.b16 %v1193, %v1192
    %v1427 = vpack.c.b16 %v1195, %v1194
    %v1428 = vpack.c.b16 %v1197, %v1196
    %v1429 = vpack.c.b16 %v1199, %v1198
    %v1430 = vpack.c.b16 %v1201, %v1200
    %v1431 = vpack.c.b16 %v1203, %v1202
    %v1432 = vpack.c.b16 %v1205, %v1204
    %v1433 = vpack.c.b16 %v1207, %v1206
    %v1434 = vpack.c.b16 %v1209, %v1208
    %v1435 = vpack.c.b16 %v1211, %v1210
    %v1436 = vpack.c.b16 %v1213, %v1212
    %v1437 = vpack.c.b16 %v1215, %v1214
    %v1438 = vpack.c.b16 %v1217, %v1216
    %v1439 = vpack.c.b16 %v1219, %v1218
    %v1440 = vpack.c.b16 %v1221, %v1220
    %v1441 = vpack.c.b16 %v1223, %v1222
    %v1442 = vpack.c.b16 %v1225, %v1224
    %v1443 = vpack.c.b16 %v1227, %v1226
    %v1444 = vpack.c.b16 %v1229, %v1228
    %v1445 = vpack.c.b16 %v1231, %v1230
    %v1446 = vpack.c.b16 %v1233, %v1232
    %v1447 = vpack.c.b16 %v1235, %v1234
    %v1448 = vpack.c.b16 %v1237, %v1236
    %v1449 = vpack.c.b16 %v1239, %v1238
    %v1450 = vpack.c.b16 %v1241, %v1240
    %v1451 = vpack.c.b16 %v1243, %v1242
    %v1452 = vpack.c.b16 %v1245, %v1244
    %v1453 = vpack.c.b16 %v1247, %v1246
    %v1454 = vpack.c.b16 %v1249, %v1248
    %v1455 = vpack.c.b16 %v1251, %v1250
    %v1456 = vpack.c.b16 %v1253, %v1252
    %v1457 = vpack.c.b16 %v1255, %v1254
    %v1458 = vpack.c.b16 %v1257, %v1256
    %v1459 = vpack.c.b16 %v1259, %v1258
    %v1460 = vpack.c.b16 %v1261, %v1260
    %v1461 = vpack.c.b16 %v1263, %v1262
    %v1462 = vpack.c.b16 %v1265, %v1264
    %v1463 = vpack.c.b16 %v1267, %v1266
    %v1464 = vpack.c.b16 %v1269, %v1268
    %v1465 = vpack.c.b16 %v1271, %v1270
    %v1466 = vpack.c.b16 %v1273, %v1272
    %v1467 = vpack.c.b16 %v1275, %v1274
    %v1468 = vpack.c.b16 %v1277, %v1276
    %v1469 = vpack.c.b16 %v1279, %v1278
    %v1470 = vpack.c.b16 %v1281, %v1280
    %v1471 = vpack.c.b16 %v1283, %v1282
    %v1472 = vpack.c.b16 %v1285, %v1284
    %v1473 = vpack.c.b16 %v1287, %v1286
    %v1474 = vpack.c.b16 %v1289, %v1288
    %v1475 = vpack.c.b16 %v1291, %v1290
    %v1476 = vpack.c.b16 %v1293, %v1292
    %v1477 = vpack.c.b16 %v1295, %v1294
    %v1478 = vpack.c.b16 %v1297, %v1296
    %v1479 = vpack.c.b16 %v1299, %v1298
    %v1480 = vpack.c.b16 %v1301, %v1300
    %v1481 = vpack.c.b16 %v1303, %v1302
    %v1482 = vpack.c.b16 %v1305, %v1304
    %v1483 = vpack.c.b16 %v1307, %v1306
    %v1484 = vpack.c.b16 %v1309, %v1308
    %v1485 = vpack.c.b16 %v1311, %v1310
    %v1486 = vpack.c.b16 %v1313, %v1312
    %v1487 = vpack.c.b16 %v1315, %v1314
    %v1488 = vpack.c.b16 %v1317, %v1316
    %v1489 = vpack.c.b16 %v1319, %v1318
    %v1490 = vpack.c.b16 %v1321, %v1320
    %v1491 = vpack.c.b16 %v1323, %v1322
    %v1492 = vpack.c.b16 %v1325, %v1324
    %v1493 = vpack.c.b16 %v1327, %v1326
    %v1494 = vpack.c.b16 %v1329, %v1328
    %v1495 = vpack.c.b16 %v1331, %v1330
    %v1496 = vpack.c.b16 %v1333, %v1332
    %v1497 = vpack.c.b16 %v1335, %v1334
    %v1498 = vpack.c.b16 %v1337, %v1336
    %v1499 = vpack.c.b16 %v1339, %v1338
    %v1500 = vpack.c.b16 %v1341, %v1340
    %v1501 = vpack.c.b16 %v1343, %v1342
    %v1502 = vpack.c.b16 %v1345, %v1344
    %v1503 = vpack.c.b16 %v1347, %v1346
    %v1504 = vpack.c.b16 %v1349, %v1348
    %v1505 = vpack.c.b16 %v1351, %v1350
    %v1506 = vpack.c.b16 %v1353, %v1352
    %v1507 = vpack.c.b16 %v1355, %v1354
    %v1508 = vpack.c.b16 %v1357, %v1356
    %v1509 = vpack.c.b16 %v1359, %v1358
    %v1510 = vpack.c.b16 %v1361, %v1360
    %v1511 = vpack.c.b16 %v1363, %v1362
    %v1512 = vpack.c.b16 %v1365, %v1364
    %v1513 = vpack.c.b16 %v1367, %v1366
    %v1514 = vpack.c.b16 %v1369, %v1368
    %v1515 = vpack.c.b16 %v1371, %v1370
    %v1516 = vpack.c.b16 %v1373, %v1372
    %v1517 = vpack.c.b16 %v1375, %v1374
    %v1518 = vpack.c.b16 %v1377, %v1376
    %v1519 = vpack.c.b16 %v1379, %v1378
    %v1520 = vpack.c.b16 %v1381, %v1380
    %v1521 = vpack.c.b16 %v1383, %v1382
    %v1522 = vpack.c.b16 %v1385, %v1384
    %v1523 = vpack.c.b16 %v1387, %v1386
    %v1524 = vpack.c.b16 %v1389, %v1388
    %v1525 = vpack.c.b16 %v1391, %v1390
    %v1526 = vpack.c.b16 %v1393, %v1392
    %v1527 = vpack.c.b16 %v1395, %v1394
    %v1528 = vpack.c.b16 %v1397, %v1396
    %v1529 = vpack.c.b16 %v1399, %v1398
    %v1530 = vpack.c.b16 %v1401, %v1400
    %v1531 = vpack.c.b16 %v1403, %v1402
    %1660 = vmatprep.subr.bf16.mxu0 0
    %1661 = vmatpush1.bf16.msra.mxu0 %v1411
    %1662 = vmatprep.subr.bf16.mxu0 0
    %1663 = vmatpush1.bf16.msra.mxu0 %v1410
    %1664 = vmatprep.subr.bf16.mxu0 0
    %1665 = vmatpush1.bf16.msra.mxu0 %v1409
    %1666 = vmatprep.subr.bf16.mxu0 0
    %1667 = vmatpush1.bf16.msra.mxu0 %v1408
    %1668 = vmatprep.subr.bf16.mxu0 0
    %1669 = vmatpush1.bf16.msra.mxu0 %v1407
    %1670 = vmatprep.subr.bf16.mxu0 0
    %1671 = vmatpush1.bf16.msra.mxu0 %v1406
    %1672 = vmatprep.subr.bf16.mxu0 0
    %1673 = vmatpush1.bf16.msra.mxu0 %v1405
    %1674 = vmatprep.subr.bf16.mxu0 0
    %1675 = vmatpush1.bf16.msra.mxu0 %v1404
    %1676 = vmatprep.subr.bf16.mxu0 0
    %1677 = vmatpush2.bf16.msra.mxu0 %v1419
    %1678 = vmatprep.subr.bf16.mxu0 0
    %1679 = vmatpush2.bf16.msra.mxu0 %v1418
    %1680 = vmatprep.subr.bf16.mxu0 0
    %1681 = vmatpush2.bf16.msra.mxu0 %v1417
    %1682 = vmatprep.subr.bf16.mxu0 0
    %1683 = vmatpush2.bf16.msra.mxu0 %v1416
    %1684 = vmatprep.subr.bf16.mxu0 0
    %1685 = vmatpush2.bf16.msra.mxu0 %v1415
    %1686 = vmatprep.subr.bf16.mxu0 0
    %1687 = vmatpush2.bf16.msra.mxu0 %v1414
    %1688 = vmatprep.subr.bf16.mxu0 0
    %1689 = vmatpush2.bf16.msra.mxu0 %v1413
    %1690 = vmatprep.subr.bf16.mxu0 0
    %1691 = vmatpush2.bf16.msra.mxu0 %v1412
    %1692 = vmatprep.mubr.bf16.mxu0 %v463
    %1693 = vmatmul.mubr.bf16.gmra.mxu0 %v462
    %v1694 = vpop.f32.mrf.mxu0
    %v1695 = vadd.f32 %v887, %v1694
    %v1696 = vpop.f32.mrf.mxu0
    %v1697 = vpop.f32.mrf.mxu0
    %v1698 = vpop.f32.mrf.mxu0
    %1699 = vdwg.mxu0
    %1700 = vmatprep.subr.bf16.mxu0 0
    %1701 = vmatpush1.bf16.msra.mxu0 %v1427
    %1702 = vmatprep.subr.bf16.mxu0 0
    %1703 = vmatpush1.bf16.msra.mxu0 %v1426
    %1704 = vmatprep.subr.bf16.mxu0 0
    %1705 = vmatpush1.bf16.msra.mxu0 %v1425
    %1706 = vmatprep.subr.bf16.mxu0 0
    %1707 = vmatpush1.bf16.msra.mxu0 %v1424
    %1708 = vmatprep.subr.bf16.mxu0 0
    %1709 = vmatpush1.bf16.msra.mxu0 %v1423
    %1710 = vmatprep.subr.bf16.mxu0 0
    %1711 = vmatpush1.bf16.msra.mxu0 %v1422
    %1712 = vmatprep.subr.bf16.mxu0 0
    %1713 = vmatpush1.bf16.msra.mxu0 %v1421
    %1714 = vmatprep.subr.bf16.mxu0 0
    %1715 = vmatpush1.bf16.msra.mxu0 %v1420
    %1716 = vmatprep.subr.bf16.mxu0 0
    %1717 = vmatpush2.bf16.msra.mxu0 %v1435
    %1718 = vmatprep.subr.bf16.mxu0 0
    %1719 = vmatpush2.bf16.msra.mxu0 %v1434
    %1720 = vmatprep.subr.bf16.mxu0 0
    %1721 = vmatpush2.bf16.msra.mxu0 %v1433
    %1722 = vmatprep.subr.bf16.mxu0 0
    %1723 = vmatpush2.bf16.msra.mxu0 %v1432
    %1724 = vmatprep.subr.bf16.mxu0 0
    %1725 = vmatpush2.bf16.msra.mxu0 %v1431
    %1726 = vmatprep.subr.bf16.mxu0 0
    %1727 = vmatpush2.bf16.msra.mxu0 %v1430
    %1728 = vmatprep.subr.bf16.mxu0 0
    %1729 = vmatpush2.bf16.msra.mxu0 %v1429
    %1730 = vmatprep.subr.bf16.mxu0 0
    %1731 = vmatpush2.bf16.msra.mxu0 %v1428
    %1732 = vmatprep.mubr.bf16.mxu0 %v465
    %1733 = vmatmul.mubr.bf16.gmra.mxu0 %v464
    %v1734 = vpop.f32.mrf.mxu0
    %v1735 = vadd.f32 %v1695, %v1734
    %v1736 = vpop.f32.mrf.mxu0
    %v1737 = vpop.f32.mrf.mxu0
    %v1738 = vpop.f32.mrf.mxu0
    %1739 = vdwg.mxu0
    %1740 = vmatprep.subr.bf16.mxu0 0
    %1741 = vmatpush1.bf16.msra.mxu0 %v1443
    %1742 = vmatprep.subr.bf16.mxu0 0
    %1743 = vmatpush1.bf16.msra.mxu0 %v1442
    %1744 = vmatprep.subr.bf16.mxu0 0
    %1745 = vmatpush1.bf16.msra.mxu0 %v1441
    %1746 = vmatprep.subr.bf16.mxu0 0
    %1747 = vmatpush1.bf16.msra.mxu0 %v1440
    %1748 = vmatprep.subr.bf16.mxu0 0
    %1749 = vmatpush1.bf16.msra.mxu0 %v1439
    %1750 = vmatprep.subr.bf16.mxu0 0
    %1751 = vmatpush1.bf16.msra.mxu0 %v1438
    %1752 = vmatprep.subr.bf16.mxu0 0
    %1753 = vmatpush1.bf16.msra.mxu0 %v1437
    %1754 = vmatprep.subr.bf16.mxu0 0
    %1755 = vmatpush1.bf16.msra.mxu0 %v1436
    %1756 = vmatprep.subr.bf16.mxu0 0
    %1757 = vmatpush2.bf16.msra.mxu0 %v1451
    %1758 = vmatprep.subr.bf16.mxu0 0
    %1759 = vmatpush2.bf16.msra.mxu0 %v1450
    %1760 = vmatprep.subr.bf16.mxu0 0
    %1761 = vmatpush2.bf16.msra.mxu0 %v1449
    %1762 = vmatprep.subr.bf16.mxu0 0
    %1763 = vmatpush2.bf16.msra.mxu0 %v1448
    %1764 = vmatprep.subr.bf16.mxu0 0
    %1765 = vmatpush2.bf16.msra.mxu0 %v1447
    %1766 = vmatprep.subr.bf16.mxu0 0
    %1767 = vmatpush2.bf16.msra.mxu0 %v1446
    %1768 = vmatprep.subr.bf16.mxu0 0
    %1769 = vmatpush2.bf16.msra.mxu0 %v1445
    %1770 = vmatprep.subr.bf16.mxu0 0
    %1771 = vmatpush2.bf16.msra.mxu0 %v1444
    %1772 = vmatprep.mubr.bf16.mxu0 %v467
    %1773 = vmatmul.mubr.bf16.gmra.mxu0 %v466
    %v1774 = vpop.f32.mrf.mxu0
    %v1775 = vadd.f32 %v1735, %v1774
    %v1776 = vpop.f32.mrf.mxu0
    %v1777 = vpop.f32.mrf.mxu0
    %v1778 = vpop.f32.mrf.mxu0
    %1779 = vdwg.mxu0
    %1780 = vmatprep.subr.bf16.mxu0 0
    %1781 = vmatpush1.bf16.msra.mxu0 %v1459
    %1782 = vmatprep.subr.bf16.mxu0 0
    %1783 = vmatpush1.bf16.msra.mxu0 %v1458
    %1784 = vmatprep.subr.bf16.mxu0 0
    %1785 = vmatpush1.bf16.msra.mxu0 %v1457
    %1786 = vmatprep.subr.bf16.mxu0 0
    %1787 = vmatpush1.bf16.msra.mxu0 %v1456
    %1788 = vmatprep.subr.bf16.mxu0 0
    %1789 = vmatpush1.bf16.msra.mxu0 %v1455
    %1790 = vmatprep.subr.bf16.mxu0 0
    %1791 = vmatpush1.bf16.msra.mxu0 %v1454
    %1792 = vmatprep.subr.bf16.mxu0 0
    %1793 = vmatpush1.bf16.msra.mxu0 %v1453
    %1794 = vmatprep.subr.bf16.mxu0 0
    %1795 = vmatpush1.bf16.msra.mxu0 %v1452
    %1796 = vmatprep.subr.bf16.mxu0 0
    %1797 = vmatpush2.bf16.msra.mxu0 %v1467
    %1798 = vmatprep.subr.bf16.mxu0 0
    %1799 = vmatpush2.bf16.msra.mxu0 %v1466
    %1800 = vmatprep.subr.bf16.mxu0 0
    %1801 = vmatpush2.bf16.msra.mxu0 %v1465
    %1802 = vmatprep.subr.bf16.mxu0 0
    %1803 = vmatpush2.bf16.msra.mxu0 %v1464
    %1804 = vmatprep.subr.bf16.mxu0 0
    %1805 = vmatpush2.bf16.msra.mxu0 %v1463
    %1806 = vmatprep.subr.bf16.mxu0 0
    %1807 = vmatpush2.bf16.msra.mxu0 %v1462
    %1808 = vmatprep.subr.bf16.mxu0 0
    %1809 = vmatpush2.bf16.msra.mxu0 %v1461
    %1810 = vmatprep.subr.bf16.mxu0 0
    %1811 = vmatpush2.bf16.msra.mxu0 %v1460
    %1812 = vmatprep.mubr.bf16.mxu0 %v469
    %1813 = vmatmul.mubr.bf16.gmra.mxu0 %v468
    %v1814 = vpop.f32.mrf.mxu0
    %v1815 = vadd.f32 %v1775, %v1814
    %v1816 = vpop.f32.mrf.mxu0
    %v1817 = vpop.f32.mrf.mxu0
    %v1818 = vpop.f32.mrf.mxu0
    %1819 = vdwg.mxu0
    %1820 = vmatprep.subr.bf16.mxu0 0
    %1821 = vmatpush1.bf16.msra.mxu0 %v1475
    %1822 = vmatprep.subr.bf16.mxu0 0
    %1823 = vmatpush1.bf16.msra.mxu0 %v1474
    %1824 = vmatprep.subr.bf16.mxu0 0
    %1825 = vmatpush1.bf16.msra.mxu0 %v1473
    %1826 = vmatprep.subr.bf16.mxu0 0
    %1827 = vmatpush1.bf16.msra.mxu0 %v1472
    %1828 = vmatprep.subr.bf16.mxu0 0
    %1829 = vmatpush1.bf16.msra.mxu0 %v1471
    %1830 = vmatprep.subr.bf16.mxu0 0
    %1831 = vmatpush1.bf16.msra.mxu0 %v1470
    %1832 = vmatprep.subr.bf16.mxu0 0
    %1833 = vmatpush1.bf16.msra.mxu0 %v1469
    %1834 = vmatprep.subr.bf16.mxu0 0
    %1835 = vmatpush1.bf16.msra.mxu0 %v1468
    %1836 = vmatprep.subr.bf16.mxu0 0
    %1837 = vmatpush2.bf16.msra.mxu0 %v1483
    %1838 = vmatprep.subr.bf16.mxu0 0
    %1839 = vmatpush2.bf16.msra.mxu0 %v1482
    %1840 = vmatprep.subr.bf16.mxu0 0
    %1841 = vmatpush2.bf16.msra.mxu0 %v1481
    %1842 = vmatprep.subr.bf16.mxu0 0
    %1843 = vmatpush2.bf16.msra.mxu0 %v1480
    %1844 = vmatprep.subr.bf16.mxu0 0
    %1845 = vmatpush2.bf16.msra.mxu0 %v1479
    %1846 = vmatprep.subr.bf16.mxu0 0
    %1847 = vmatpush2.bf16.msra.mxu0 %v1478
    %1848 = vmatprep.subr.bf16.mxu0 0
    %1849 = vmatpush2.bf16.msra.mxu0 %v1477
    %1850 = vmatprep.subr.bf16.mxu0 0
    %1851 = vmatpush2.bf16.msra.mxu0 %v1476
    %1852 = vmatprep.mubr.bf16.mxu0 %v471
    %1853 = vmatmul.mubr.bf16.gmra.mxu0 %v470
    %v1854 = vpop.f32.mrf.mxu0
    %v1855 = vadd.f32 %v1815, %v1854
    %v1856 = vpop.f32.mrf.mxu0
    %v1857 = vpop.f32.mrf.mxu0
    %v1858 = vpop.f32.mrf.mxu0
    %1859 = vdwg.mxu0
    %1860 = vmatprep.subr.bf16.mxu0 0
    %1861 = vmatpush1.bf16.msra.mxu0 %v1491
    %1862 = vmatprep.subr.bf16.mxu0 0
    %1863 = vmatpush1.bf16.msra.mxu0 %v1490
    %1864 = vmatprep.subr.bf16.mxu0 0
    %1865 = vmatpush1.bf16.msra.mxu0 %v1489
    %1866 = vmatprep.subr.bf16.mxu0 0
    %1867 = vmatpush1.bf16.msra.mxu0 %v1488
    %1868 = vmatprep.subr.bf16.mxu0 0
    %1869 = vmatpush1.bf16.msra.mxu0 %v1487
    %1870 = vmatprep.subr.bf16.mxu0 0
    %1871 = vmatpush1.bf16.msra.mxu0 %v1486
    %1872 = vmatprep.subr.bf16.mxu0 0
    %1873 = vmatpush1.bf16.msra.mxu0 %v1485
    %1874 = vmatprep.subr.bf16.mxu0 0
    %1875 = vmatpush1.bf16.msra.mxu0 %v1484
    %1876 = vmatprep.subr.bf16.mxu0 0
    %1877 = vmatpush2.bf16.msra.mxu0 %v1499
    %1878 = vmatprep.subr.bf16.mxu0 0
    %1879 = vmatpush2.bf16.msra.mxu0 %v1498
    %1880 = vmatprep.subr.bf16.mxu0 0
    %1881 = vmatpush2.bf16.msra.mxu0 %v1497
    %1882 = vmatprep.subr.bf16.mxu0 0
    %1883 = vmatpush2.bf16.msra.mxu0 %v1496
    %1884 = vmatprep.subr.bf16.mxu0 0
    %1885 = vmatpush2.bf16.msra.mxu0 %v1495
    %1886 = vmatprep.subr.bf16.mxu0 0
    %1887 = vmatpush2.bf16.msra.mxu0 %v1494
    %1888 = vmatprep.subr.bf16.mxu0 0
    %1889 = vmatpush2.bf16.msra.mxu0 %v1493
    %1890 = vmatprep.subr.bf16.mxu0 0
    %1891 = vmatpush2.bf16.msra.mxu0 %v1492
    %1892 = vmatprep.mubr.bf16.mxu0 %v473
    %1893 = vmatmul.mubr.bf16.gmra.mxu0 %v472
    %v1894 = vpop.f32.mrf.mxu0
    %v1895 = vadd.f32 %v1855, %v1894
    %v1896 = vpop.f32.mrf.mxu0
    %v1897 = vpop.f32.mrf.mxu0
    %v1898 = vpop.f32.mrf.mxu0
    %1899 = vdwg.mxu0
    %1900 = vmatprep.subr.bf16.mxu0 0
    %1901 = vmatpush1.bf16.msra.mxu0 %v1507
    %1902 = vmatprep.subr.bf16.mxu0 0
    %1903 = vmatpush1.bf16.msra.mxu0 %v1506
    %1904 = vmatprep.subr.bf16.mxu0 0
    %1905 = vmatpush1.bf16.msra.mxu0 %v1505
    %1906 = vmatprep.subr.bf16.mxu0 0
    %1907 = vmatpush1.bf16.msra.mxu0 %v1504
    %1908 = vmatprep.subr.bf16.mxu0 0
    %1909 = vmatpush1.bf16.msra.mxu0 %v1503
    %1910 = vmatprep.subr.bf16.mxu0 0
    %1911 = vmatpush1.bf16.msra.mxu0 %v1502
    %1912 = vmatprep.subr.bf16.mxu0 0
    %1913 = vmatpush1.bf16.msra.mxu0 %v1501
    %1914 = vmatprep.subr.bf16.mxu0 0
    %1915 = vmatpush1.bf16.msra.mxu0 %v1500
    %1916 = vmatprep.subr.bf16.mxu0 0
    %1917 = vmatpush2.bf16.msra.mxu0 %v1515
    %1918 = vmatprep.subr.bf16.mxu0 0
    %1919 = vmatpush2.bf16.msra.mxu0 %v1514
    %1920 = vmatprep.subr.bf16.mxu0 0
    %1921 = vmatpush2.bf16.msra.mxu0 %v1513
    %1922 = vmatprep.subr.bf16.mxu0 0
    %1923 = vmatpush2.bf16.msra.mxu0 %v1512
    %1924 = vmatprep.subr.bf16.mxu0 0
    %1925 = vmatpush2.bf16.msra.mxu0 %v1511
    %1926 = vmatprep.subr.bf16.mxu0 0
    %1927 = vmatpush2.bf16.msra.mxu0 %v1510
    %1928 = vmatprep.subr.bf16.mxu0 0
    %1929 = vmatpush2.bf16.msra.mxu0 %v1509
    %1930 = vmatprep.subr.bf16.mxu0 0
    %1931 = vmatpush2.bf16.msra.mxu0 %v1508
    %1932 = vmatprep.mubr.bf16.mxu0 %v475
    %1933 = vmatmul.mubr.bf16.gmra.mxu0 %v474
    %v1934 = vpop.f32.mrf.mxu0
    %v1935 = vadd.f32 %v1895, %v1934
    %v1936 = vpop.f32.mrf.mxu0
    %v1937 = vpop.f32.mrf.mxu0
    %v1938 = vpop.f32.mrf.mxu0
    %1939 = vdwg.mxu0
    %1940 = vmatprep.subr.bf16.mxu0 0
    %1941 = vmatpush1.bf16.msra.mxu0 %v1523
    %1942 = vmatprep.subr.bf16.mxu0 0
    %1943 = vmatpush1.bf16.msra.mxu0 %v1522
    %1944 = vmatprep.subr.bf16.mxu0 0
    %1945 = vmatpush1.bf16.msra.mxu0 %v1521
    %1946 = vmatprep.subr.bf16.mxu0 0
    %1947 = vmatpush1.bf16.msra.mxu0 %v1520
    %1948 = vmatprep.subr.bf16.mxu0 0
    %1949 = vmatpush1.bf16.msra.mxu0 %v1519
    %1950 = vmatprep.subr.bf16.mxu0 0
    %1951 = vmatpush1.bf16.msra.mxu0 %v1518
    %1952 = vmatprep.subr.bf16.mxu0 0
    %1953 = vmatpush1.bf16.msra.mxu0 %v1517
    %1954 = vmatprep.subr.bf16.mxu0 0
    %1955 = vmatpush1.bf16.msra.mxu0 %v1516
    %1956 = vmatprep.subr.bf16.mxu0 0
    %1957 = vmatpush2.bf16.msra.mxu0 %v1531
    %1958 = vmatprep.subr.bf16.mxu0 0
    %1959 = vmatpush2.bf16.msra.mxu0 %v1530
    %1960 = vmatprep.subr.bf16.mxu0 0
    %1961 = vmatpush2.bf16.msra.mxu0 %v1529
    %1962 = vmatprep.subr.bf16.mxu0 0
    %1963 = vmatpush2.bf16.msra.mxu0 %v1528
    %1964 = vmatprep.subr.bf16.mxu0 0
    %1965 = vmatpush2.bf16.msra.mxu0 %v1527
    %1966 = vmatprep.subr.bf16.mxu0 0
    %1967 = vmatpush2.bf16.msra.mxu0 %v1526
    %1968 = vmatprep.subr.bf16.mxu0 0
    %1969 = vmatpush2.bf16.msra.mxu0 %v1525
    %1970 = vmatprep.subr.bf16.mxu0 0
    %1971 = vmatpush2.bf16.msra.mxu0 %v1524
    %1972 = vmatprep.mubr.bf16.mxu0 %v477
    %1973 = vmatmul.mubr.bf16.gmra.mxu0 %v476
    %v1974 = vpop.f32.mrf.mxu0
    %v1975 = vadd.f32 %v1935, %v1974
    %v1976 = vpop.f32.mrf.mxu0
    %v1977 = vpop.f32.mrf.mxu0
    %v1978 = vpop.f32.mrf.mxu0
    %1979 = vdwg.mxu0
    %v1980 = vlaneseq
    %v1981 = vshrl.u32 %v1980, 7
    %v1982 = vsub.s32 0, %v1981
    %v1983 = vrot.slane %v426, %v1982
    %v1984 = vadd.f32 %v1975, %v1983
    %v1985 = vmax.f32 %v1984, 0.0
    %v1986 = vlaneseq
    %v1987 = vshrl.u32 %v1986, 7
    %v1988 = vsub.s32 0, %v1987
    %v1989 = vrot.slane %v427, %v1988
    %v1990 = vmul.f32 %v1985, %v1989
    %1991 = vadd.xlane.f32.xlu0 %v1990
    %v1992 = vpop.xlane.xlu0 %1991
    %s1993 = sld [smem:[#allocation2]]
    %v1994 = vstv %s1993
    %v1995 = vadd.f32 %v1992, %v1994
    %v1996 = vsub.f32 0.0, %v1995
    %v1997 = vmul.f32 %v1996, 1.442695
    %v1998 = vpow.pop %v1997
    %v1999 = vadd.f32 %v1998, 1.0
    %v2000 = vrcp.pop %v1999
    %v2001 = vmul.f32 1.0, %v2000
    %vm2002 = vcmask 7168
    %2003 = vst.msk [vmem:[%s6] sm:$0xff] %vm2002, %v2001
    // Predicated region
    $region42: #{tpu_custom_call.1} parent=1 // pred_check
      _
    $region43: #{tpu_custom_call.1} parent=1 // pred_check_branch
      %2005 = sbr.rel (0) target = $region45
    $region44: #{tpu_custom_call.1} parent=1 // pred_region
      _
    $region45: #{tpu_custom_call.1} parent=1 // pred_fallthru
      _
    // Predicated region
    $region46: #{tpu_custom_call.1} parent=1 // pred_check
      _
    $region47: #{tpu_custom_call.1} parent=1 // pred_check_branch
      %2007 = sbr.rel (0) target = $region49
    $region48: #{tpu_custom_call.1} parent=1 // pred_region
      _
    $region49: #{tpu_custom_call.1} parent=1 // pred_fallthru
      _
    %2008 = vsyncpa [#allocation4], 1
    %2009 = vsyncpa [#allocation6], 1
    %2010 = vsyncpa [#allocation9], 1

</llo_original>
